<compile_context>
chip_gen: v6e
topology: v6e:2x2x1
jax: 0.10.0
libtpu: 0.0.40
codegen_flags: <defaults>
</compile_context>

<pallas_src>
import jax
import jax.numpy as jnp
from jax.experimental import pallas as pl
from jax.experimental.pallas import tpu as pltpu

LANE = 128
SUB = 8


def _round_up(x, m):
    return (x + m - 1) // m * m


def _make_matmul_kernel(precision):
    def kernel(x_ref, w_ref, o_ref):
        # x_ref: (TM, KC_PAD)   im2col rows (+ bias lane), contraction 128-aligned
        # w_ref: (KC_PAD, TN)   weight slab (+ bias row), lane-dense
        # o_ref: (TM, TN)       lane-dense output -> unmasked full-vreg stores
        acc = jnp.dot(x_ref[...], w_ref[...],
                      preferred_element_type=jnp.float32,
                      precision=precision)
        o_ref[...] = acc.astype(o_ref.dtype)
    return kernel


def _pick_tm(M, kc_pad, tn, in_itemsize, out_itemsize, budget_bytes):
    # Largest tile (amortizes the ~0.35us/step overhead; 512-1024-row tiles
    # sit near the HBM roofline vs ~63% at 256) that still keeps >=2 grid
    # steps (two-TensorCore sharding on v7x) and fits the VMEM budget with
    # double-buffered x/out blocks plus the weight block.
    for tm in (1024, 512, 256, 128):
        if M < 2 * tm:
            continue
        ws = (2 * tm * kc_pad * in_itemsize
              + 2 * kc_pad * tn * in_itemsize
              + 2 * tm * tn * out_itemsize)
        if ws <= budget_bytes:
            return tm
    # Small problems: one block covering all rows (multiple of 16 so it also
    # works with bf16 sublane packing).
    return _round_up(max(M, SUB), 16)


def conv2d_pallas(x_nchw, weight_oihw, bias, *, stride, padding,
                  use_bf16_mxu=False):
    """Equivalent of nn.Conv2d(in, out, kernel_size, stride, padding)(x)."""
    N, Cin, H, W = x_nchw.shape
    Cout, Cin_w, K, K2 = weight_oihw.shape
    assert Cin == Cin_w and K == K2

    Hout = (H + 2 * padding - K) // stride + 1
    Wout = (W + 2 * padding - K) // stride + 1

    KC = K * K * Cin
    KC_PAD = _round_up(KC + 1, LANE)      # +1 spare lane carries the bias
    COUT_PAD = _round_up(Cout, LANE)      # lane-dense output -> unmasked vst
    M = N * Hout * Wout                   # batch folded into the MXU M axis

    out_dtype = x_nchw.dtype
    mxu_dtype = jnp.bfloat16 if use_bf16_mxu else x_nchw.dtype
    in_itemsize = jnp.dtype(mxu_dtype).itemsize
    out_itemsize = jnp.dtype(out_dtype).itemsize

    # Cout tiling: full slab when small; otherwise <=512-wide tiles so the
    # resident weight block stays bounded on v7x's 64 MiB VMEM.
    if COUT_PAD <= 512:
        TN = COUT_PAD
    else:
        TN = next(t for t in (512, 384, 256, 128) if COUT_PAD % t == 0)
    grid_n = COUT_PAD // TN

    VMEM_BLOCK_BUDGET = 32 << 20          # conservative across v5e/v6e/v7x
    TM = _pick_tm(M, KC_PAD, TN, in_itemsize, out_itemsize, VMEM_BLOCK_BUDGET)
    grid_m = pl.cdiv(M, TM)               # ragged tail masked by Pallas; no M pad

    # ---- layout-only glue in plain JAX (transpose / pad / im2col) --------
    # allow_input_fusion below lets XLA fuse this producer chain into the
    # pallas-call operand instead of materializing x_col separately in HBM.
    x_nhwc = jnp.transpose(x_nchw, (0, 2, 3, 1))
    x_sp = jnp.pad(
        x_nhwc, ((0, 0), (padding, padding), (padding, padding), (0, 0)))
    taps = [
        x_sp[:, kh:kh + stride * Hout:stride, kw:kw + stride * Wout:stride, :]
        for kh in range(K) for kw in range(K)
    ]
    taps.append(jnp.ones((N, Hout, Wout, 1), x_nchw.dtype))   # bias lane == 1.0
    x_col = jnp.concatenate(taps, axis=-1).reshape(M, KC + 1)
    if KC_PAD > KC + 1:
        # Zero pad lanes are load-bearing: they make pad lanes contribute 0.
        x_col = jnp.pad(x_col, ((0, 0), (0, KC_PAD - (KC + 1))))

    # Weight OIHW -> (K, K, Cin, Cout) -> (K*K*Cin, Cout); append the bias as
    # row KC (matches the 1.0 lane of x_col); zero-pad to 128 alignment.
    w2d = jnp.transpose(weight_oihw, (2, 3, 1, 0)).reshape(KC, Cout)
    w2d = jnp.concatenate([w2d, bias.reshape(1, Cout)], axis=0)
    w2d = jnp.pad(w2d, ((0, KC_PAD - (KC + 1)), (0, COUT_PAD - Cout)))

    if use_bf16_mxu:
        # One-time XLA-side cast: halves HBM DMA bytes on the dominant operand
        # and removes the per-step VPU cast (v5e has no bf16 VALU).
        x_col = x_col.astype(jnp.bfloat16)
        w2d = w2d.astype(jnp.bfloat16)

    # dtype-aware, bytes-dominated cost hint (flops counts real MACs only;
    # MXU utilization is (KC/KC_PAD)*(Cout/COUT_PAD) at small channel counts).
    cost = pl.CostEstimate(
        flops=2 * M * (KC + 1) * Cout,
        transcendentals=0,
        bytes_accessed=(M * KC_PAD + KC_PAD * COUT_PAD) * in_itemsize
        + M * COUT_PAD * out_itemsize,
    )

    # Per-step VMEM working set (double-buffered x/out, weight per its mode).
    w_bufs = 1 if grid_n == 1 else 2
    ws_bytes = (2 * TM * KC_PAD * in_itemsize
                + w_bufs * KC_PAD * TN * in_itemsize
                + 2 * TM * TN * out_itemsize)
    vmem_limit = min(64 << 20, max(32 << 20, 2 * ws_bytes))

    if grid_n == 1:
        # Weight block index never changes -> single buffer (halves resident
        # weight VMEM; matters most on v7x's 64 MiB).
        w_spec = pl.BlockSpec((KC_PAD, TN), lambda i, j: (0, j),
                              pipeline_mode=pl.Buffered(1))
    else:
        w_spec = pl.BlockSpec((KC_PAD, TN), lambda i, j: (0, j))

    precision = (jax.lax.Precision.HIGHEST
                 if (not use_bf16_mxu and x_nchw.dtype == jnp.float32)
                 else jax.lax.Precision.DEFAULT)
    kernel = _make_matmul_kernel(precision)

    out2d = pl.pallas_call(
        kernel,
        out_shape=jax.ShapeDtypeStruct((M, COUT_PAD), out_dtype),
        grid_spec=pltpu.PrefetchScalarGridSpec(
            num_scalar_prefetch=0,
            grid=(grid_m, grid_n),
            in_specs=[
                pl.BlockSpec((TM, KC_PAD), lambda i, j: (i, 0)),
                w_spec,
            ],
            out_specs=pl.BlockSpec((TM, TN), lambda i, j: (i, j)),
        ),
        compiler_params=pltpu.CompilerParams(
            dimension_semantics=("parallel", "parallel"),
            vmem_limit_bytes=vmem_limit,
            allow_input_fusion=[True, False],
        ),
        cost_estimate=cost,
    )(x_col, w2d)

    # Slice off the Cout zero-padding and restore NCHW.
    out = out2d[:, :Cout].reshape(N, Hout, Wout, Cout)
    return jnp.transpose(out, (0, 3, 1, 2))


if __name__ == "__main__":
    # ConvLayer(in_channels=4, out_channels=8, kernel_size=3, stride=1, padding=1)
    in_channels, out_channels, kernel_size, stride, padding = 4, 8, 3, 1, 1
    N, H, W = 2, 16, 16

    key = jax.random.PRNGKey(0)
    kx, kw, kb = jax.random.split(key, 3)
    x = jax.random.normal(kx, (N, in_channels, H, W), dtype=jnp.float32)
    # Deterministic synthetic parameters (same shapes as nn.Conv2d).
    weight = jax.random.normal(
        kw, (out_channels, in_channels, kernel_size, kernel_size),
        dtype=jnp.float32) * 0.1
    bias = jax.random.normal(kb, (out_channels,), dtype=jnp.float32) * 0.1

    out = conv2d_pallas(x, weight, bias, stride=stride, padding=padding)
    out = jax.block_until_ready(out)

    # Reference check against XLA's conv (highest precision = ground truth).
    ref = jax.lax.conv_general_dilated(
        x, weight, window_strides=(stride, stride),
        padding=[(padding, padding), (padding, padding)],
        dimension_numbers=("NCHW", "OIHW", "NCHW"),
        precision=jax.lax.Precision.HIGHEST,
    ) + bias.reshape(1, out_channels, 1, 1)
    assert out.shape == (N, out_channels, H, W), out.shape
    assert jnp.allclose(out, ref, atol=1e-4, rtol=1e-4), "mismatch vs reference conv"

    print("KERNEL_OK")
</pallas_src>

<mosaic_0001>
module attributes {stable_mosaic.version = 11 : i64} {
  func.func @kernel(%arg0: i32, %arg1: i32, %arg2: memref<256x128xf32, #tpu.memory_space<vmem>>, %arg3: memref<128x128xf32, #tpu.memory_space<vmem>>, %arg4: memref<256x128xf32, #tpu.memory_space<vmem>>) attributes {dimension_semantics = [#tpu.dimension_semantics<parallel>, #tpu.dimension_semantics<parallel>], iteration_bounds = array<i64: 2, 1>, scalar_prefetch = 0 : i64, scratch_operands = 0 : i64, tpu.core_type = #tpu.core_type<tc>, window_params = [{transform_indices = @transform_0, window_bounds = array<i64: 256, 128>}, {pipeline_mode = #tpu.pipeline_mode<synchronous>, transform_indices = @transform_1, window_bounds = array<i64: 128, 128>}, {transform_indices = @transform_2, window_bounds = array<i64: 256, 128>}]} {
    %c0 = arith.constant 0 : index
    %c0_0 = arith.constant 0 : index
    %0 = vector.load %arg2[%c0, %c0_0] : memref<256x128xf32, #tpu.memory_space<vmem>>, vector<256x128xf32>
    %c0_1 = arith.constant 0 : index
    %c0_2 = arith.constant 0 : index
    %1 = vector.load %arg3[%c0_1, %c0_2] : memref<128x128xf32, #tpu.memory_space<vmem>>, vector<128x128xf32>
    %cst = arith.constant dense<0.000000e+00> : vector<256x128xf32>
    %2 = tpu.matmul %0, %1, %cst {dimension_numbers = #tpu.dot_dimension_numbers<[1], [0], [0], [1], [0, 0, 1, 1], [], []>, precision = #tpu.contract_precision<fp32>} : vector<256x128xf32>, vector<128x128xf32>, vector<256x128xf32> -> vector<256x128xf32>
    %c0_3 = arith.constant 0 : index
    %c0_4 = arith.constant 0 : index
    %3 = vector.load %arg4[%c0_3, %c0_4] : memref<256x128xf32, #tpu.memory_space<vmem>>, vector<256x128xf32>
    tpu.vector_store %arg4[%c0_3, %c0_4], %2 {strides = array<i32>} : memref<256x128xf32, #tpu.memory_space<vmem>>, vector<256x128xf32>,
    return
  }
  func.func @transform_0(%arg0: i32, %arg1: i32) -> (i32, i32) {
    %c0_i32 = arith.constant 0 : i32
    %c0_i32_0 = arith.constant 0 : i32
    return %arg0, %c0_i32 : i32, i32
  }
  func.func @transform_1(%arg0: i32, %arg1: i32) -> (i32, i32) {
    %c0_i32 = arith.constant 0 : i32
    %c0_i32_0 = arith.constant 0 : i32
    return %c0_i32, %arg1 : i32, i32
  }
  func.func @transform_2(%arg0: i32, %arg1: i32) -> (i32, i32) {
    %c0_i32 = arith.constant 0 : i32
    return %arg0, %arg1 : i32, i32
  }
}

</mosaic_0001>

<llo_original>
// kernel: tpu_custom_call.1
$region0: #{tpu_custom_call.1}
  #allocation0 [shape = 'u32[]', space=smem, size = 0x4, offset = 0x4, fixed_abs, tag = 'smem constant byte address 0x4 - core index']
  #allocation1 [shape = 'u32[144,128]{1,0:T(1,128)}', space=vmem, size = 0x12000, scoped, tag = 'internal scratch']
  %s0 = inlined_call_operand.hbm [shape: f32[512,128], index: 0, kind: input, shape index: {}]
  %s1 = inlined_call_operand.hbm [shape: f32[128,128], index: 1, kind: input, shape index: {}]
  %s2 = inlined_call_operand.hbm [shape: f32[512,128], index: 2, kind: output, shape index: {}]
  %s3 = sld [smem:[#allocation0]]
  $region49: #{tpu_custom_call.1} parent=0
    _
  %s5 = ssub.s32 1, %s3
  %s6 = scalar_select 0, %s5, %s3
  $region1: #{tpu_custom_call.1} parent=0
    #allocation2 [shape = 'u8[262144]{0}', space=vmem, size = 0x40000, scoped, tag = 'input window, operand 0']
    #allocation3 [shape = 's32[2]{0}', space=sflag, size = 0x8, scoped, tag = 'scoped memory for tpu_custom_call.1']
    #allocation4 [shape = 's32[2]{0}', space=sflag, size = 0x8, scoped, tag = 'scoped memory for tpu_custom_call.1']
    #allocation5 [shape = 'u8[65536]{0}', space=vmem, size = 0x10000, scoped, tag = 'input window, operand 1, single buffered']
    #allocation6 [shape = 's32[1]{0}', space=sflag, size = 0x4, scoped, tag = 'scoped memory for tpu_custom_call.1']
    #allocation7 [shape = 'u8[262144]{0}', space=vmem, size = 0x40000, scoped, tag = 'output window, operand 0']
    %7 = vsyncpa [#allocation3], 0
    %s8 = scalar_lea.sflag [#allocation3], 1
    %9 = vsyncpa %s8, 0
    %10 = vsyncpa [#allocation6], 0
    %11 = vsyncpa [#allocation4], 0
    %s12 = scalar_lea.sflag [#allocation4], 1
    %13 = vsyncpa %s12, 0
    loop: start=0, step=1, limit=4
    $region2: #{tpu_custom_call.1} parent=1 // loop_pre_header
      _
    $region3: #{tpu_custom_call.1} parent=1 // loop_header
      %s15 = sphi 0, %s19
      %p16 = scmp.ge.s32.totalorder %s15, 4
      %s22 = sphi 0, %s34
      %s23 = sphi 0, %s30
      %s24 = sphi 0, %s22
      %s25 = sphi 0, %s23
      %s26 = sphi 0, %s24
      %s27 = sphi 0, %s25
      %s37 = sphi 0, %s39
      %s40 = sphi 0, %s37
      %s41 = sphi 0, %s40
      %s57 = sphi 0, %s41
      %s63 = sphi 0, %s65
      %s66 = sphi 0, %s63
      %s67 = sphi 0, %s66
      %s83 = sphi 0, %s67
      %s91 = sphi 0, %s93
      %s94 = sphi 0, %s91
      %s95 = sphi 0, %s94
      %s111 = sphi 0, %s95
    $region4: #{tpu_custom_call.1} parent=1 // loop_header_branch
      %18 = sbr.rel (%p16) target = $region8
    $region5: #{tpu_custom_call.1} parent=1 // loop_body
      %s20 = ssub.s32 %s15, 1
      %s21 = ssub.s32 %s15, 2
      %s28 = sadd.s32 1, %s23
      %p29 = scmp.ge.s32.totalorder %s28, 1
      %s30 = scalar_select %p29, 0, %s28
      %s31 = sadd.s32 1, %s22
      %s32 = scalar_select %p29, %s31, %s22
      %p33 = scmp.ge.s32.totalorder %s32, 2
      %s34 = scalar_select %p33, 0, %s32
      %s35 = ssub.s32 %s22, %s34
      %p36 = scmp.eq.s32.totalorder %s35, 0
      %s38 = sadd.s32 %s37, 1
      %s39 = scalar_select %p36, %s37, %s38
      %p42 = pneg %p36
      %p43 = scmp.eq.s32.totalorder %s15, 1
      %p44 = por %p42, %p43
      %p45 = scmp.ne.s32.totalorder %s37, %s40
      %p46 = scmp.eq.s32.totalorder %s15, 0
      %p47 = por %p45, %p46
      %p48 = scmp.ne.s32.totalorder %s37, %s40
      %p49 = scmp.eq.s32.totalorder %s20, 1
      %p50 = por %p48, %p49
      %p51 = scmp.ne.s32.totalorder %s40, %s41
      %p52 = scmp.eq.s32.totalorder %s20, 0
      %p53 = por %p51, %p52
      %p54 = scmp.ne.s32.totalorder %s40, %s41
      %p55 = scmp.eq.s32.totalorder %s21, 1
      %p56 = por %p54, %p55
      %p58 = scmp.ne.s32.totalorder %s41, %s57
      %p59 = scmp.eq.s32.totalorder %s21, 0
      %p60 = por %p58, %p59
      %s61 = ssub.s32 %s23, %s30
      %p62 = scmp.eq.s32.totalorder %s61, 0
      %s64 = sadd.s32 %s63, 1
      %s65 = scalar_select %p62, %s63, %s64
      %p68 = pneg %p62
      %p69 = scmp.eq.s32.totalorder %s15, 1
      %p70 = por %p68, %p69
      %p71 = scmp.ne.s32.totalorder %s63, %s66
      %p72 = scmp.eq.s32.totalorder %s15, 0
      %p73 = por %p71, %p72
      %p74 = scmp.ne.s32.totalorder %s63, %s66
      %p75 = scmp.eq.s32.totalorder %s20, 1
      %p76 = por %p74, %p75
      %p77 = scmp.ne.s32.totalorder %s66, %s67
      %p78 = scmp.eq.s32.totalorder %s20, 0
      %p79 = por %p77, %p78
      %p80 = scmp.ne.s32.totalorder %s66, %s67
      %p81 = scmp.eq.s32.totalorder %s21, 1
      %p82 = por %p80, %p81
      %p84 = scmp.ne.s32.totalorder %s67, %s83
      %p85 = scmp.eq.s32.totalorder %s21, 0
      %p86 = por %p84, %p85
      %s87 = ssub.s32 %s22, %s34
      %s88 = ssub.s32 %s23, %s30
      %s89 = sor.u32 %s87, %s88
      %p90 = scmp.eq.s32.totalorder %s89, 0
      %s92 = sadd.s32 %s91, 1
      %s93 = scalar_select %p90, %s91, %s92
      %p96 = pneg %p90
      %p97 = scmp.eq.s32.totalorder %s15, 1
      %p98 = por %p96, %p97
      %p99 = scmp.ne.s32.totalorder %s91, %s94
      %p100 = scmp.eq.s32.totalorder %s15, 0
      %p101 = por %p99, %p100
      %p102 = scmp.ne.s32.totalorder %s91, %s94
      %p103 = scmp.eq.s32.totalorder %s20, 1
      %p104 = por %p102, %p103
      %p105 = scmp.ne.s32.totalorder %s94, %s95
      %p106 = scmp.eq.s32.totalorder %s20, 0
      %p107 = por %p105, %p106
      %p108 = scmp.ne.s32.totalorder %s94, %s95
      %p109 = scmp.eq.s32.totalorder %s21, 1
      %p110 = por %p108, %p109
      %p112 = scmp.ne.s32.totalorder %s95, %s111
      %p113 = scmp.eq.s32.totalorder %s21, 0
      %p114 = por %p112, %p113
      %p115 = scmp.le.s32.totalorder 1, %s15
      %p116 = scmp.lt.s32.totalorder %s15, 3
      %p117 = pnand %p115, %p116
      %p118 = pneg %p117
      // Predicated region
      $region9: #{tpu_custom_call.1} parent=5 // pred_check
        _
      $region10: #{tpu_custom_call.1} parent=5 // pred_check_branch
        %120 = sbr.rel (%p117) target = $region12
      $region11: #{tpu_custom_call.1} parent=5 // pred_region
        %s121 = ssub.s32 %s15, 1
        // Predicated region
        $region13: #{tpu_custom_call.1} parent=11 // pred_check
          %p122 = pneg %p79
        $region14: #{tpu_custom_call.1} parent=11 // pred_check_branch
          %124 = sbr.rel (%p122) target = $region16
        $region15: #{tpu_custom_call.1} parent=11 // pred_region
          %s126 = ssub.s32 2048, 2048
          %127 = vsyncadd [#allocation6], %s126
          %s128 = smul.addr %s25, 128
          %s129 = scalar_lea.hbm %s1, %s128
          %s130 = sshll.u32 [#allocation5], 4
          %s131 = int_to_ptr.vmem [resolvable:$true] %s130
          %136 = dma.hbm_to_vmem [thread:$0]  %s129, 2048, %s131, [#allocation6], 128, 128, 8
        $region16: #{tpu_custom_call.1} parent=11 // pred_fallthru
          _
      $region12: #{tpu_custom_call.1} parent=5 // pred_fallthru
        _
      %p137 = scmp.lt.s32.totalorder %s15, 2
      // Predicated region
      $region17: #{tpu_custom_call.1} parent=5 // pred_check
        %p138 = pneg %p137
      $region18: #{tpu_custom_call.1} parent=5 // pred_check_branch
        %140 = sbr.rel (%p138) target = $region20
      $region19: #{tpu_custom_call.1} parent=5 // pred_region
        // Predicated region
        $region21: #{tpu_custom_call.1} parent=19 // pred_check
          %p141 = pneg %p47
        $region22: #{tpu_custom_call.1} parent=19 // pred_check_branch
          %143 = sbr.rel (%p141) target = $region24
        $region23: #{tpu_custom_call.1} parent=19 // pred_region
          %s144 = sand.u32 %s37, 1
          %s145 = scalar_lea.sflag [#allocation3], %s144
          %s146 = sand.u32 %s37, 1
          %s147 = smul.addr %s146, 256
          %s148 = scalar_lea.vmem [#allocation2], %s147
          %s149 = smul.u32 32, %s22
          %s151 = ssub.s32 4096, 4096
          %152 = vsyncadd %s145, %s151
          %s153 = smul.addr %s149, 128
          %s154 = scalar_lea.hbm %s0, %s153
          %s155 = sshll.u32 %s148, 4
          %s156 = int_to_ptr.vmem [resolvable:$true] %s155
          %161 = dma.hbm_to_vmem [thread:$0]  %s154, 4096, %s156, %s145, 128, 128, 8
        $region24: #{tpu_custom_call.1} parent=19 // pred_fallthru
          _
      $region20: #{tpu_custom_call.1} parent=5 // pred_fallthru
        _
      %p162 = scmp.le.s32.totalorder 1, %s15
      %p163 = scmp.lt.s32.totalorder %s15, 3
      %p164 = pnand %p162, %p163
      %p165 = pneg %p164
      // Predicated region
      $region25: #{tpu_custom_call.1} parent=5 // pred_check
        _
      $region26: #{tpu_custom_call.1} parent=5 // pred_check_branch
        %167 = sbr.rel (%p164) target = $region28
      $region27: #{tpu_custom_call.1} parent=5 // pred_region
        %s168 = ssub.s32 %s15, 1
        %s169 = sand.u32 %s40, 1
        %s170 = scalar_lea.sflag [#allocation3], %s169
        %s171 = sand.u32 %s40, 1
        %s172 = smul.addr %s171, 256
        %s173 = scalar_lea.vmem [#allocation2], %s172
        // Predicated region
        $region29: #{tpu_custom_call.1} parent=27 // pred_check
          %p174 = pneg %p53
        $region30: #{tpu_custom_call.1} parent=27 // pred_check_branch
          %176 = sbr.rel (%p174) target = $region32
        $region31: #{tpu_custom_call.1} parent=27 // pred_region
          %177 = dma.done %s170, 4096
        $region32: #{tpu_custom_call.1} parent=27 // pred_fallthru
          _
        // Predicated region
        $region33: #{tpu_custom_call.1} parent=27 // pred_check
          %p178 = pneg %p79
        $region34: #{tpu_custom_call.1} parent=27 // pred_check_branch
          %180 = sbr.rel (%p178) target = $region36
        $region35: #{tpu_custom_call.1} parent=27 // pred_region
          %181 = dma.done [#allocation6], 2048
        $region36: #{tpu_custom_call.1} parent=27 // pred_fallthru
          _
        %s182 = sand.u32 %s40, 1
        %s183 = scalar_lea.sflag [#allocation3], %s182
        %s184 = sand.u32 %s40, 1
        %s185 = smul.addr %s184, 256
        %s186 = scalar_lea.vmem [#allocation2], %s185
        %p187 = pneg %p53
        %p188 = pneg %p50
        %p189 = pneg %p79
        %p190 = pneg %p76
        %p191 = pneg %p107
        %p192 = pneg %p104
        %s193 = sand.u32 %s94, 1
        %s194 = scalar_lea.sflag [#allocation4], %s193
        %s195 = sand.u32 %s94, 1
        %s196 = smul.addr %s195, 256
        %s197 = scalar_lea.vmem [#allocation7], %s196
        %s198 = smul.u32 32, %s24
        %s199 = smul.u32 32, %s24
        %v200 = vld [vmem:[%s173] sm:$0xff]
        %v201 = vld [vmem:[%s173 + $0x8] sm:$0xff]
        %v202 = vld [vmem:[%s173 + $0x10] sm:$0xff]
        %v203 = vld [vmem:[%s173 + $0x18] sm:$0xff]
        %v204 = vld [vmem:[%s173 + $0x20] sm:$0xff]
        %v205 = vld [vmem:[%s173 + $0x28] sm:$0xff]
        %v206 = vld [vmem:[%s173 + $0x30] sm:$0xff]
        %v207 = vld [vmem:[%s173 + $0x38] sm:$0xff]
        %v208 = vld [vmem:[%s173 + $0x40] sm:$0xff]
        %v209 = vld [vmem:[%s173 + $0x48] sm:$0xff]
        %v210 = vld [vmem:[%s173 + $0x50] sm:$0xff]
        %v211 = vld [vmem:[%s173 + $0x58] sm:$0xff]
        %v212 = vld [vmem:[%s173 + $0x60] sm:$0xff]
        %v213 = vld [vmem:[%s173 + $0x68] sm:$0xff]
        %v214 = vld [vmem:[%s173 + $0x70] sm:$0xff]
        %v215 = vld [vmem:[%s173 + $0x78] sm:$0xff]
        %v216 = vld [vmem:[%s173 + $0x80] sm:$0xff]
        %v217 = vld [vmem:[%s173 + $0x88] sm:$0xff]
        %v218 = vld [vmem:[%s173 + $0x90] sm:$0xff]
        %v219 = vld [vmem:[%s173 + $0x98] sm:$0xff]
        %v220 = vld [vmem:[%s173 + $0xa0] sm:$0xff]
        %v221 = vld [vmem:[%s173 + $0xa8] sm:$0xff]
        %v222 = vld [vmem:[%s173 + $0xb0] sm:$0xff]
        %v223 = vld [vmem:[%s173 + $0xb8] sm:$0xff]
        %v224 = vld [vmem:[%s173 + $0xc0] sm:$0xff]
        %v225 = vld [vmem:[%s173 + $0xc8] sm:$0xff]
        %v226 = vld [vmem:[%s173 + $0xd0] sm:$0xff]
        %v227 = vld [vmem:[%s173 + $0xd8] sm:$0xff]
        %v228 = vld [vmem:[%s173 + $0xe0] sm:$0xff]
        %v229 = vld [vmem:[%s173 + $0xe8] sm:$0xff]
        %v230 = vld [vmem:[%s173 + $0xf0] sm:$0xff]
        %v231 = vld [vmem:[%s173 + $0xf8] sm:$0xff]
        %v232 = vld [vmem:[#allocation5] sm:$0xff]
        %v233 = vld [vmem:[#allocation5 + $0x8] sm:$0xff]
        %v234 = vld [vmem:[#allocation5 + $0x10] sm:$0xff]
        %v235 = vld [vmem:[#allocation5 + $0x18] sm:$0xff]
        %v236 = vld [vmem:[#allocation5 + $0x20] sm:$0xff]
        %v237 = vld [vmem:[#allocation5 + $0x28] sm:$0xff]
        %v238 = vld [vmem:[#allocation5 + $0x30] sm:$0xff]
        %v239 = vld [vmem:[#allocation5 + $0x38] sm:$0xff]
        %v240 = vld [vmem:[#allocation5 + $0x40] sm:$0xff]
        %v241 = vld [vmem:[#allocation5 + $0x48] sm:$0xff]
        %v242 = vld [vmem:[#allocation5 + $0x50] sm:$0xff]
        %v243 = vld [vmem:[#allocation5 + $0x58] sm:$0xff]
        %v244 = vld [vmem:[#allocation5 + $0x60] sm:$0xff]
        %v245 = vld [vmem:[#allocation5 + $0x68] sm:$0xff]
        %v246 = vld [vmem:[#allocation5 + $0x70] sm:$0xff]
        %v247 = vld [vmem:[#allocation5 + $0x78] sm:$0xff]
        %248 = vmatprep.subr.mxu0 0.0
        %v249 = vand.u32 %v247, 4294901760
        %250 = vmatpush1.msra.mxu0 %v249
        %251 = vmatprep.subr.mxu0 0.0
        %v252 = vand.u32 %v246, 4294901760
        %253 = vmatpush1.msra.mxu0 %v252
        %254 = vmatprep.subr.mxu0 0.0
        %v255 = vand.u32 %v245, 4294901760
        %256 = vmatpush1.msra.mxu0 %v255
        %257 = vmatprep.subr.mxu0 0.0
        %v258 = vand.u32 %v244, 4294901760
        %259 = vmatpush1.msra.mxu0 %v258
        %260 = vmatprep.subr.mxu0 0.0
        %v261 = vand.u32 %v243, 4294901760
        %262 = vmatpush1.msra.mxu0 %v261
        %263 = vmatprep.subr.mxu0 0.0
        %v264 = vand.u32 %v242, 4294901760
        %265 = vmatpush1.msra.mxu0 %v264
        %266 = vmatprep.subr.mxu0 0.0
        %v267 = vand.u32 %v241, 4294901760
        %268 = vmatpush1.msra.mxu0 %v267
        %269 = vmatprep.subr.mxu0 0.0
        %v270 = vand.u32 %v240, 4294901760
        %271 = vmatpush1.msra.mxu0 %v270
        %272 = vmatprep.subr.mxu0 0.0
        %v273 = vand.u32 %v239, 4294901760
        %274 = vmatpush1.msra.mxu0 %v273
        %275 = vmatprep.subr.mxu0 0.0
        %v276 = vand.u32 %v238, 4294901760
        %277 = vmatpush1.msra.mxu0 %v276
        %278 = vmatprep.subr.mxu0 0.0
        %v279 = vand.u32 %v237, 4294901760
        %280 = vmatpush1.msra.mxu0 %v279
        %281 = vmatprep.subr.mxu0 0.0
        %v282 = vand.u32 %v236, 4294901760
        %283 = vmatpush1.msra.mxu0 %v282
        %284 = vmatprep.subr.mxu0 0.0
        %v285 = vand.u32 %v235, 4294901760
        %286 = vmatpush1.msra.mxu0 %v285
        %287 = vmatprep.subr.mxu0 0.0
        %v288 = vand.u32 %v234, 4294901760
        %289 = vmatpush1.msra.mxu0 %v288
        %290 = vmatprep.subr.mxu0 0.0
        %v291 = vand.u32 %v233, 4294901760
        %292 = vmatpush1.msra.mxu0 %v291
        %293 = vmatprep.subr.mxu0 0.0
        %v294 = vand.u32 %v232, 4294901760
        %295 = vmatpush1.msra.mxu0 %v294
        %296 = vmatprep.subr.mxu0 0.0
        %297 = vmatpush2.msra.mxu0 0.0
        %298 = vmatprep.subr.mxu0 0.0
        %299 = vmatpush2.msra.mxu0 0.0
        %300 = vmatprep.subr.mxu0 0.0
        %301 = vmatpush2.msra.mxu0 0.0
        %302 = vmatprep.subr.mxu0 0.0
        %303 = vmatpush2.msra.mxu0 0.0
        %304 = vmatprep.subr.mxu0 0.0
        %305 = vmatpush2.msra.mxu0 0.0
        %306 = vmatprep.subr.mxu0 0.0
        %307 = vmatpush2.msra.mxu0 0.0
        %308 = vmatprep.subr.mxu0 0.0
        %309 = vmatpush2.msra.mxu0 0.0
        %310 = vmatprep.subr.mxu0 0.0
        %311 = vmatpush2.msra.mxu0 0.0
        %312 = vmatprep.subr.mxu0 0.0
        %313 = vmatpush2.msra.mxu0 0.0
        %314 = vmatprep.subr.mxu0 0.0
        %315 = vmatpush2.msra.mxu0 0.0
        %316 = vmatprep.subr.mxu0 0.0
        %317 = vmatpush2.msra.mxu0 0.0
        %318 = vmatprep.subr.mxu0 0.0
        %319 = vmatpush2.msra.mxu0 0.0
        %320 = vmatprep.subr.mxu0 0.0
        %321 = vmatpush2.msra.mxu0 0.0
        %322 = vmatprep.subr.mxu0 0.0
        %323 = vmatpush2.msra.mxu0 0.0
        %324 = vmatprep.subr.mxu0 0.0
        %325 = vmatpush2.msra.mxu0 0.0
        %326 = vmatprep.subr.mxu0 0.0
        %327 = vmatpush2.msra.mxu0 0.0
        %328 = vmatprep.mubr.f32.mxu0 0.0
        %v329 = vand.u32 %v200, 4294901760
        %v330 = vsub.f32 %v200, %v329
        %v331 = vand.u32 %v330, 4294901760
        %v332 = vsub.f32 %v330, %v331
        %v333 = vand.u32 %v332, 4294901760
        %334 = vmatmul.mubr.f32.gmra.mxu0 %v333
        %v335 = vpop.f32.mrf.mxu0
        %v336 = vadd.f32 0.0, %v335
        %v337 = vpop.f32.mrf.mxu0
        %338 = vmatprep.mubr.f32.mxu0 0.0
        %v339 = vand.u32 %v201, 4294901760
        %v340 = vsub.f32 %v201, %v339
        %v341 = vand.u32 %v340, 4294901760
        %v342 = vsub.f32 %v340, %v341
        %v343 = vand.u32 %v342, 4294901760
        %344 = vmatmul.mubr.f32.gmra.mxu0 %v343
        %v345 = vpop.f32.mrf.mxu0
        %v346 = vadd.f32 0.0, %v345
        %v347 = vpop.f32.mrf.mxu0
        %348 = vmatprep.mubr.f32.mxu0 0.0
        %v349 = vand.u32 %v202, 4294901760
        %v350 = vsub.f32 %v202, %v349
        %v351 = vand.u32 %v350, 4294901760
        %v352 = vsub.f32 %v350, %v351
        %v353 = vand.u32 %v352, 4294901760
        %354 = vmatmul.mubr.f32.gmra.mxu0 %v353
        %v355 = vpop.f32.mrf.mxu0
        %v356 = vadd.f32 0.0, %v355
        %v357 = vpop.f32.mrf.mxu0
        %358 = vmatprep.mubr.f32.mxu0 0.0
        %v359 = vand.u32 %v203, 4294901760
        %v360 = vsub.f32 %v203, %v359
        %v361 = vand.u32 %v360, 4294901760
        %v362 = vsub.f32 %v360, %v361
        %v363 = vand.u32 %v362, 4294901760
        %364 = vmatmul.mubr.f32.gmra.mxu0 %v363
        %v365 = vpop.f32.mrf.mxu0
        %v366 = vadd.f32 0.0, %v365
        %v367 = vpop.f32.mrf.mxu0
        %368 = vmatprep.mubr.f32.mxu0 0.0
        %v369 = vand.u32 %v204, 4294901760
        %v370 = vsub.f32 %v204, %v369
        %v371 = vand.u32 %v370, 4294901760
        %v372 = vsub.f32 %v370, %v371
        %v373 = vand.u32 %v372, 4294901760
        %374 = vmatmul.mubr.f32.gmra.mxu0 %v373
        %v375 = vpop.f32.mrf.mxu0
        %v376 = vadd.f32 0.0, %v375
        %v377 = vpop.f32.mrf.mxu0
        %378 = vmatprep.mubr.f32.mxu0 0.0
        %v379 = vand.u32 %v205, 4294901760
        %v380 = vsub.f32 %v205, %v379
        %v381 = vand.u32 %v380, 4294901760
        %v382 = vsub.f32 %v380, %v381
        %v383 = vand.u32 %v382, 4294901760
        %384 = vmatmul.mubr.f32.gmra.mxu0 %v383
        %v385 = vpop.f32.mrf.mxu0
        %v386 = vadd.f32 0.0, %v385
        %v387 = vpop.f32.mrf.mxu0
        %388 = vmatprep.mubr.f32.mxu0 0.0
        %v389 = vand.u32 %v206, 4294901760
        %v390 = vsub.f32 %v206, %v389
        %v391 = vand.u32 %v390, 4294901760
        %v392 = vsub.f32 %v390, %v391
        %v393 = vand.u32 %v392, 4294901760
        %394 = vmatmul.mubr.f32.gmra.mxu0 %v393
        %v395 = vpop.f32.mrf.mxu0
        %v396 = vadd.f32 0.0, %v395
        %v397 = vpop.f32.mrf.mxu0
        %398 = vmatprep.mubr.f32.mxu0 0.0
        %v399 = vand.u32 %v207, 4294901760
        %v400 = vsub.f32 %v207, %v399
        %v401 = vand.u32 %v400, 4294901760
        %v402 = vsub.f32 %v400, %v401
        %v403 = vand.u32 %v402, 4294901760
        %404 = vmatmul.mubr.f32.gmra.mxu0 %v403
        %v405 = vpop.f32.mrf.mxu0
        %v406 = vadd.f32 0.0, %v405
        %v407 = vpop.f32.mrf.mxu0
        %408 = vmatprep.mubr.f32.mxu0 0.0
        %v409 = vand.u32 %v208, 4294901760
        %v410 = vsub.f32 %v208, %v409
        %v411 = vand.u32 %v410, 4294901760
        %v412 = vsub.f32 %v410, %v411
        %v413 = vand.u32 %v412, 4294901760
        %414 = vmatmul.mubr.f32.gmra.mxu0 %v413
        %v415 = vpop.f32.mrf.mxu0
        %v416 = vadd.f32 0.0, %v415
        %v417 = vpop.f32.mrf.mxu0
        %418 = vmatprep.mubr.f32.mxu0 0.0
        %v419 = vand.u32 %v209, 4294901760
        %v420 = vsub.f32 %v209, %v419
        %v421 = vand.u32 %v420, 4294901760
        %v422 = vsub.f32 %v420, %v421
        %v423 = vand.u32 %v422, 4294901760
        %424 = vmatmul.mubr.f32.gmra.mxu0 %v423
        %v425 = vpop.f32.mrf.mxu0
        %v426 = vadd.f32 0.0, %v425
        %v427 = vpop.f32.mrf.mxu0
        %428 = vmatprep.mubr.f32.mxu0 0.0
        %v429 = vand.u32 %v210, 4294901760
        %v430 = vsub.f32 %v210, %v429
        %v431 = vand.u32 %v430, 4294901760
        %v432 = vsub.f32 %v430, %v431
        %v433 = vand.u32 %v432, 4294901760
        %434 = vmatmul.mubr.f32.gmra.mxu0 %v433
        %v435 = vpop.f32.mrf.mxu0
        %v436 = vadd.f32 0.0, %v435
        %v437 = vpop.f32.mrf.mxu0
        %438 = vmatprep.mubr.f32.mxu0 0.0
        %v439 = vand.u32 %v211, 4294901760
        %v440 = vsub.f32 %v211, %v439
        %v441 = vand.u32 %v440, 4294901760
        %v442 = vsub.f32 %v440, %v441
        %v443 = vand.u32 %v442, 4294901760
        %444 = vmatmul.mubr.f32.gmra.mxu0 %v443
        %v445 = vpop.f32.mrf.mxu0
        %v446 = vadd.f32 0.0, %v445
        %v447 = vpop.f32.mrf.mxu0
        %448 = vmatprep.mubr.f32.mxu0 0.0
        %v449 = vand.u32 %v212, 4294901760
        %v450 = vsub.f32 %v212, %v449
        %v451 = vand.u32 %v450, 4294901760
        %v452 = vsub.f32 %v450, %v451
        %v453 = vand.u32 %v452, 4294901760
        %454 = vmatmul.mubr.f32.gmra.mxu0 %v453
        %v455 = vpop.f32.mrf.mxu0
        %v456 = vadd.f32 0.0, %v455
        %v457 = vpop.f32.mrf.mxu0
        %458 = vmatprep.mubr.f32.mxu0 0.0
        %v459 = vand.u32 %v213, 4294901760
        %v460 = vsub.f32 %v213, %v459
        %v461 = vand.u32 %v460, 4294901760
        %v462 = vsub.f32 %v460, %v461
        %v463 = vand.u32 %v462, 4294901760
        %464 = vmatmul.mubr.f32.gmra.mxu0 %v463
        %v465 = vpop.f32.mrf.mxu0
        %v466 = vadd.f32 0.0, %v465
        %v467 = vpop.f32.mrf.mxu0
        %468 = vmatprep.mubr.f32.mxu0 0.0
        %v469 = vand.u32 %v214, 4294901760
        %v470 = vsub.f32 %v214, %v469
        %v471 = vand.u32 %v470, 4294901760
        %v472 = vsub.f32 %v470, %v471
        %v473 = vand.u32 %v472, 4294901760
        %474 = vmatmul.mubr.f32.gmra.mxu0 %v473
        %v475 = vpop.f32.mrf.mxu0
        %v476 = vadd.f32 0.0, %v475
        %v477 = vpop.f32.mrf.mxu0
        %478 = vmatprep.mubr.f32.mxu0 0.0
        %v479 = vand.u32 %v215, 4294901760
        %v480 = vsub.f32 %v215, %v479
        %v481 = vand.u32 %v480, 4294901760
        %v482 = vsub.f32 %v480, %v481
        %v483 = vand.u32 %v482, 4294901760
        %484 = vmatmul.mubr.f32.gmra.mxu0 %v483
        %v485 = vpop.f32.mrf.mxu0
        %v486 = vadd.f32 0.0, %v485
        %v487 = vpop.f32.mrf.mxu0
        %488 = vmatprep.mubr.f32.mxu0 0.0
        %v489 = vand.u32 %v216, 4294901760
        %v490 = vsub.f32 %v216, %v489
        %v491 = vand.u32 %v490, 4294901760
        %v492 = vsub.f32 %v490, %v491
        %v493 = vand.u32 %v492, 4294901760
        %494 = vmatmul.mubr.f32.gmra.mxu0 %v493
        %v495 = vpop.f32.mrf.mxu0
        %v496 = vadd.f32 0.0, %v495
        %v497 = vpop.f32.mrf.mxu0
        %498 = vmatprep.mubr.f32.mxu0 0.0
        %v499 = vand.u32 %v217, 4294901760
        %v500 = vsub.f32 %v217, %v499
        %v501 = vand.u32 %v500, 4294901760
        %v502 = vsub.f32 %v500, %v501
        %v503 = vand.u32 %v502, 4294901760
        %504 = vmatmul.mubr.f32.gmra.mxu0 %v503
        %v505 = vpop.f32.mrf.mxu0
        %v506 = vadd.f32 0.0, %v505
        %v507 = vpop.f32.mrf.mxu0
        %508 = vmatprep.mubr.f32.mxu0 0.0
        %v509 = vand.u32 %v218, 4294901760
        %v510 = vsub.f32 %v218, %v509
        %v511 = vand.u32 %v510, 4294901760
        %v512 = vsub.f32 %v510, %v511
        %v513 = vand.u32 %v512, 4294901760
        %514 = vmatmul.mubr.f32.gmra.mxu0 %v513
        %v515 = vpop.f32.mrf.mxu0
        %v516 = vadd.f32 0.0, %v515
        %v517 = vpop.f32.mrf.mxu0
        %518 = vmatprep.mubr.f32.mxu0 0.0
        %v519 = vand.u32 %v219, 4294901760
        %v520 = vsub.f32 %v219, %v519
        %v521 = vand.u32 %v520, 4294901760
        %v522 = vsub.f32 %v520, %v521
        %v523 = vand.u32 %v522, 4294901760
        %524 = vmatmul.mubr.f32.gmra.mxu0 %v523
        %v525 = vpop.f32.mrf.mxu0
        %v526 = vadd.f32 0.0, %v525
        %v527 = vpop.f32.mrf.mxu0
        %528 = vmatprep.mubr.f32.mxu0 0.0
        %v529 = vand.u32 %v220, 4294901760
        %v530 = vsub.f32 %v220, %v529
        %v531 = vand.u32 %v530, 4294901760
        %v532 = vsub.f32 %v530, %v531
        %v533 = vand.u32 %v532, 4294901760
        %534 = vmatmul.mubr.f32.gmra.mxu0 %v533
        %v535 = vpop.f32.mrf.mxu0
        %v536 = vadd.f32 0.0, %v535
        %v537 = vpop.f32.mrf.mxu0
        %538 = vmatprep.mubr.f32.mxu0 0.0
        %v539 = vand.u32 %v221, 4294901760
        %v540 = vsub.f32 %v221, %v539
        %v541 = vand.u32 %v540, 4294901760
        %v542 = vsub.f32 %v540, %v541
        %v543 = vand.u32 %v542, 4294901760
        %544 = vmatmul.mubr.f32.gmra.mxu0 %v543
        %v545 = vpop.f32.mrf.mxu0
        %v546 = vadd.f32 0.0, %v545
        %v547 = vpop.f32.mrf.mxu0
        %548 = vmatprep.mubr.f32.mxu0 0.0
        %v549 = vand.u32 %v222, 4294901760
        %v550 = vsub.f32 %v222, %v549
        %v551 = vand.u32 %v550, 4294901760
        %v552 = vsub.f32 %v550, %v551
        %v553 = vand.u32 %v552, 4294901760
        %554 = vmatmul.mubr.f32.gmra.mxu0 %v553
        %v555 = vpop.f32.mrf.mxu0
        %v556 = vadd.f32 0.0, %v555
        %v557 = vpop.f32.mrf.mxu0
        %558 = vmatprep.mubr.f32.mxu0 0.0
        %v559 = vand.u32 %v223, 4294901760
        %v560 = vsub.f32 %v223, %v559
        %v561 = vand.u32 %v560, 4294901760
        %v562 = vsub.f32 %v560, %v561
        %v563 = vand.u32 %v562, 4294901760
        %564 = vmatmul.mubr.f32.gmra.mxu0 %v563
        %v565 = vpop.f32.mrf.mxu0
        %v566 = vadd.f32 0.0, %v565
        %v567 = vpop.f32.mrf.mxu0
        %568 = vmatprep.mubr.f32.mxu0 0.0
        %v569 = vand.u32 %v224, 4294901760
        %v570 = vsub.f32 %v224, %v569
        %v571 = vand.u32 %v570, 4294901760
        %v572 = vsub.f32 %v570, %v571
        %v573 = vand.u32 %v572, 4294901760
        %574 = vmatmul.mubr.f32.gmra.mxu0 %v573
        %v575 = vpop.f32.mrf.mxu0
        %v576 = vadd.f32 0.0, %v575
        %v577 = vpop.f32.mrf.mxu0
        %578 = vmatprep.mubr.f32.mxu0 0.0
        %v579 = vand.u32 %v225, 4294901760
        %v580 = vsub.f32 %v225, %v579
        %v581 = vand.u32 %v580, 4294901760
        %v582 = vsub.f32 %v580, %v581
        %v583 = vand.u32 %v582, 4294901760
        %584 = vmatmul.mubr.f32.gmra.mxu0 %v583
        %v585 = vpop.f32.mrf.mxu0
        %v586 = vadd.f32 0.0, %v585
        %v587 = vpop.f32.mrf.mxu0
        %588 = vmatprep.mubr.f32.mxu0 0.0
        %v589 = vand.u32 %v226, 4294901760
        %v590 = vsub.f32 %v226, %v589
        %v591 = vand.u32 %v590, 4294901760
        %v592 = vsub.f32 %v590, %v591
        %v593 = vand.u32 %v592, 4294901760
        %594 = vmatmul.mubr.f32.gmra.mxu0 %v593
        %v595 = vpop.f32.mrf.mxu0
        %v596 = vadd.f32 0.0, %v595
        %v597 = vpop.f32.mrf.mxu0
        %598 = vmatprep.mubr.f32.mxu0 0.0
        %v599 = vand.u32 %v227, 4294901760
        %v600 = vsub.f32 %v227, %v599
        %v601 = vand.u32 %v600, 4294901760
        %v602 = vsub.f32 %v600, %v601
        %v603 = vand.u32 %v602, 4294901760
        %604 = vmatmul.mubr.f32.gmra.mxu0 %v603
        %v605 = vpop.f32.mrf.mxu0
        %v606 = vadd.f32 0.0, %v605
        %v607 = vpop.f32.mrf.mxu0
        %608 = vmatprep.mubr.f32.mxu0 0.0
        %v609 = vand.u32 %v228, 4294901760
        %v610 = vsub.f32 %v228, %v609
        %v611 = vand.u32 %v610, 4294901760
        %v612 = vsub.f32 %v610, %v611
        %v613 = vand.u32 %v612, 4294901760
        %614 = vmatmul.mubr.f32.gmra.mxu0 %v613
        %v615 = vpop.f32.mrf.mxu0
        %v616 = vadd.f32 0.0, %v615
        %v617 = vpop.f32.mrf.mxu0
        %618 = vmatprep.mubr.f32.mxu0 0.0
        %v619 = vand.u32 %v229, 4294901760
        %v620 = vsub.f32 %v229, %v619
        %v621 = vand.u32 %v620, 4294901760
        %v622 = vsub.f32 %v620, %v621
        %v623 = vand.u32 %v622, 4294901760
        %624 = vmatmul.mubr.f32.gmra.mxu0 %v623
        %v625 = vpop.f32.mrf.mxu0
        %v626 = vadd.f32 0.0, %v625
        %v627 = vpop.f32.mrf.mxu0
        %628 = vmatprep.mubr.f32.mxu0 0.0
        %v629 = vand.u32 %v230, 4294901760
        %v630 = vsub.f32 %v230, %v629
        %v631 = vand.u32 %v630, 4294901760
        %v632 = vsub.f32 %v630, %v631
        %v633 = vand.u32 %v632, 4294901760
        %634 = vmatmul.mubr.f32.gmra.mxu0 %v633
        %v635 = vpop.f32.mrf.mxu0
        %v636 = vadd.f32 0.0, %v635
        %v637 = vpop.f32.mrf.mxu0
        %638 = vmatprep.mubr.f32.mxu0 0.0
        %v639 = vand.u32 %v231, 4294901760
        %v640 = vsub.f32 %v231, %v639
        %v641 = vand.u32 %v640, 4294901760
        %v642 = vsub.f32 %v640, %v641
        %v643 = vand.u32 %v642, 4294901760
        %644 = vmatmul.mubr.f32.gmra.mxu0 %v643
        %v645 = vpop.f32.mrf.mxu0
        %v646 = vadd.f32 0.0, %v645
        %v647 = vpop.f32.mrf.mxu0
        %648 = vdwg.mxu0
        %649 = vmatprep.subr.mxu0 0.0
        %v650 = vand.u32 %v247, 4294901760
        %v651 = vsub.f32 %v247, %v650
        %v652 = vand.u32 %v651, 4294901760
        %v653 = vsub.f32 %v651, %v652
        %v654 = vand.u32 %v653, 4294901760
        %655 = vmatpush1.msra.mxu0 %v654
        %656 = vmatprep.subr.mxu0 0.0
        %v657 = vand.u32 %v246, 4294901760
        %v658 = vsub.f32 %v246, %v657
        %v659 = vand.u32 %v658, 4294901760
        %v660 = vsub.f32 %v658, %v659
        %v661 = vand.u32 %v660, 4294901760
        %662 = vmatpush1.msra.mxu0 %v661
        %663 = vmatprep.subr.mxu0 0.0
        %v664 = vand.u32 %v245, 4294901760
        %v665 = vsub.f32 %v245, %v664
        %v666 = vand.u32 %v665, 4294901760
        %v667 = vsub.f32 %v665, %v666
        %v668 = vand.u32 %v667, 4294901760
        %669 = vmatpush1.msra.mxu0 %v668
        %670 = vmatprep.subr.mxu0 0.0
        %v671 = vand.u32 %v244, 4294901760
        %v672 = vsub.f32 %v244, %v671
        %v673 = vand.u32 %v672, 4294901760
        %v674 = vsub.f32 %v672, %v673
        %v675 = vand.u32 %v674, 4294901760
        %676 = vmatpush1.msra.mxu0 %v675
        %677 = vmatprep.subr.mxu0 0.0
        %v678 = vand.u32 %v243, 4294901760
        %v679 = vsub.f32 %v243, %v678
        %v680 = vand.u32 %v679, 4294901760
        %v681 = vsub.f32 %v679, %v680
        %v682 = vand.u32 %v681, 4294901760
        %683 = vmatpush1.msra.mxu0 %v682
        %684 = vmatprep.subr.mxu0 0.0
        %v685 = vand.u32 %v242, 4294901760
        %v686 = vsub.f32 %v242, %v685
        %v687 = vand.u32 %v686, 4294901760
        %v688 = vsub.f32 %v686, %v687
        %v689 = vand.u32 %v688, 4294901760
        %690 = vmatpush1.msra.mxu0 %v689
        %691 = vmatprep.subr.mxu0 0.0
        %v692 = vand.u32 %v241, 4294901760
        %v693 = vsub.f32 %v241, %v692
        %v694 = vand.u32 %v693, 4294901760
        %v695 = vsub.f32 %v693, %v694
        %v696 = vand.u32 %v695, 4294901760
        %697 = vmatpush1.msra.mxu0 %v696
        %698 = vmatprep.subr.mxu0 0.0
        %v699 = vand.u32 %v240, 4294901760
        %v700 = vsub.f32 %v240, %v699
        %v701 = vand.u32 %v700, 4294901760
        %v702 = vsub.f32 %v700, %v701
        %v703 = vand.u32 %v702, 4294901760
        %704 = vmatpush1.msra.mxu0 %v703
        %705 = vmatprep.subr.mxu0 0.0
        %v706 = vand.u32 %v239, 4294901760
        %v707 = vsub.f32 %v239, %v706
        %v708 = vand.u32 %v707, 4294901760
        %v709 = vsub.f32 %v707, %v708
        %v710 = vand.u32 %v709, 4294901760
        %711 = vmatpush1.msra.mxu0 %v710
        %712 = vmatprep.subr.mxu0 0.0
        %v713 = vand.u32 %v238, 4294901760
        %v714 = vsub.f32 %v238, %v713
        %v715 = vand.u32 %v714, 4294901760
        %v716 = vsub.f32 %v714, %v715
        %v717 = vand.u32 %v716, 4294901760
        %718 = vmatpush1.msra.mxu0 %v717
        %719 = vmatprep.subr.mxu0 0.0
        %v720 = vand.u32 %v237, 4294901760
        %v721 = vsub.f32 %v237, %v720
        %v722 = vand.u32 %v721, 4294901760
        %v723 = vsub.f32 %v721, %v722
        %v724 = vand.u32 %v723, 4294901760
        %725 = vmatpush1.msra.mxu0 %v724
        %726 = vmatprep.subr.mxu0 0.0
        %v727 = vand.u32 %v236, 4294901760
        %v728 = vsub.f32 %v236, %v727
        %v729 = vand.u32 %v728, 4294901760
        %v730 = vsub.f32 %v728, %v729
        %v731 = vand.u32 %v730, 4294901760
        %732 = vmatpush1.msra.mxu0 %v731
        %733 = vmatprep.subr.mxu0 0.0
        %v734 = vand.u32 %v235, 4294901760
        %v735 = vsub.f32 %v235, %v734
        %v736 = vand.u32 %v735, 4294901760
        %v737 = vsub.f32 %v735, %v736
        %v738 = vand.u32 %v737, 4294901760
        %739 = vmatpush1.msra.mxu0 %v738
        %740 = vmatprep.subr.mxu0 0.0
        %v741 = vand.u32 %v234, 4294901760
        %v742 = vsub.f32 %v234, %v741
        %v743 = vand.u32 %v742, 4294901760
        %v744 = vsub.f32 %v742, %v743
        %v745 = vand.u32 %v744, 4294901760
        %746 = vmatpush1.msra.mxu0 %v745
        %747 = vmatprep.subr.mxu0 0.0
        %v748 = vand.u32 %v233, 4294901760
        %v749 = vsub.f32 %v233, %v748
        %v750 = vand.u32 %v749, 4294901760
        %v751 = vsub.f32 %v749, %v750
        %v752 = vand.u32 %v751, 4294901760
        %753 = vmatpush1.msra.mxu0 %v752
        %754 = vmatprep.subr.mxu0 0.0
        %v755 = vand.u32 %v232, 4294901760
        %v756 = vsub.f32 %v232, %v755
        %v757 = vand.u32 %v756, 4294901760
        %v758 = vsub.f32 %v756, %v757
        %v759 = vand.u32 %v758, 4294901760
        %760 = vmatpush1.msra.mxu0 %v759
        %761 = vmatprep.subr.mxu0 0.0
        %762 = vmatpush2.msra.mxu0 0.0
        %763 = vmatprep.subr.mxu0 0.0
        %764 = vmatpush2.msra.mxu0 0.0
        %765 = vmatprep.subr.mxu0 0.0
        %766 = vmatpush2.msra.mxu0 0.0
        %767 = vmatprep.subr.mxu0 0.0
        %768 = vmatpush2.msra.mxu0 0.0
        %769 = vmatprep.subr.mxu0 0.0
        %770 = vmatpush2.msra.mxu0 0.0
        %771 = vmatprep.subr.mxu0 0.0
        %772 = vmatpush2.msra.mxu0 0.0
        %773 = vmatprep.subr.mxu0 0.0
        %774 = vmatpush2.msra.mxu0 0.0
        %775 = vmatprep.subr.mxu0 0.0
        %776 = vmatpush2.msra.mxu0 0.0
        %777 = vmatprep.subr.mxu0 0.0
        %778 = vmatpush2.msra.mxu0 0.0
        %779 = vmatprep.subr.mxu0 0.0
        %780 = vmatpush2.msra.mxu0 0.0
        %781 = vmatprep.subr.mxu0 0.0
        %782 = vmatpush2.msra.mxu0 0.0
        %783 = vmatprep.subr.mxu0 0.0
        %784 = vmatpush2.msra.mxu0 0.0
        %785 = vmatprep.subr.mxu0 0.0
        %786 = vmatpush2.msra.mxu0 0.0
        %787 = vmatprep.subr.mxu0 0.0
        %788 = vmatpush2.msra.mxu0 0.0
        %789 = vmatprep.subr.mxu0 0.0
        %790 = vmatpush2.msra.mxu0 0.0
        %791 = vmatprep.subr.mxu0 0.0
        %792 = vmatpush2.msra.mxu0 0.0
        %793 = vmatprep.mubr.f32.mxu0 0.0
        %v794 = vand.u32 %v200, 4294901760
        %795 = vmatmul.mubr.f32.gmra.mxu0 %v794
        %v796 = vpop.f32.mrf.mxu0
        %v797 = vadd.f32 %v336, %v796
        %v798 = vpop.f32.mrf.mxu0
        %799 = vmatprep.mubr.f32.mxu0 0.0
        %v800 = vand.u32 %v201, 4294901760
        %801 = vmatmul.mubr.f32.gmra.mxu0 %v800
        %v802 = vpop.f32.mrf.mxu0
        %v803 = vadd.f32 %v346, %v802
        %v804 = vpop.f32.mrf.mxu0
        %805 = vmatprep.mubr.f32.mxu0 0.0
        %v806 = vand.u32 %v202, 4294901760
        %807 = vmatmul.mubr.f32.gmra.mxu0 %v806
        %v808 = vpop.f32.mrf.mxu0
        %v809 = vadd.f32 %v356, %v808
        %v810 = vpop.f32.mrf.mxu0
        %811 = vmatprep.mubr.f32.mxu0 0.0
        %v812 = vand.u32 %v203, 4294901760
        %813 = vmatmul.mubr.f32.gmra.mxu0 %v812
        %v814 = vpop.f32.mrf.mxu0
        %v815 = vadd.f32 %v366, %v814
        %v816 = vpop.f32.mrf.mxu0
        %817 = vmatprep.mubr.f32.mxu0 0.0
        %v818 = vand.u32 %v204, 4294901760
        %819 = vmatmul.mubr.f32.gmra.mxu0 %v818
        %v820 = vpop.f32.mrf.mxu0
        %v821 = vadd.f32 %v376, %v820
        %v822 = vpop.f32.mrf.mxu0
        %823 = vmatprep.mubr.f32.mxu0 0.0
        %v824 = vand.u32 %v205, 4294901760
        %825 = vmatmul.mubr.f32.gmra.mxu0 %v824
        %v826 = vpop.f32.mrf.mxu0
        %v827 = vadd.f32 %v386, %v826
        %v828 = vpop.f32.mrf.mxu0
        %829 = vmatprep.mubr.f32.mxu0 0.0
        %v830 = vand.u32 %v206, 4294901760
        %831 = vmatmul.mubr.f32.gmra.mxu0 %v830
        %v832 = vpop.f32.mrf.mxu0
        %v833 = vadd.f32 %v396, %v832
        %v834 = vpop.f32.mrf.mxu0
        %835 = vmatprep.mubr.f32.mxu0 0.0
        %v836 = vand.u32 %v207, 4294901760
        %837 = vmatmul.mubr.f32.gmra.mxu0 %v836
        %v838 = vpop.f32.mrf.mxu0
        %v839 = vadd.f32 %v406, %v838
        %v840 = vpop.f32.mrf.mxu0
        %841 = vmatprep.mubr.f32.mxu0 0.0
        %v842 = vand.u32 %v208, 4294901760
        %843 = vmatmul.mubr.f32.gmra.mxu0 %v842
        %v844 = vpop.f32.mrf.mxu0
        %v845 = vadd.f32 %v416, %v844
        %v846 = vpop.f32.mrf.mxu0
        %847 = vmatprep.mubr.f32.mxu0 0.0
        %v848 = vand.u32 %v209, 4294901760
        %849 = vmatmul.mubr.f32.gmra.mxu0 %v848
        %v850 = vpop.f32.mrf.mxu0
        %v851 = vadd.f32 %v426, %v850
        %v852 = vpop.f32.mrf.mxu0
        %853 = vmatprep.mubr.f32.mxu0 0.0
        %v854 = vand.u32 %v210, 4294901760
        %855 = vmatmul.mubr.f32.gmra.mxu0 %v854
        %v856 = vpop.f32.mrf.mxu0
        %v857 = vadd.f32 %v436, %v856
        %v858 = vpop.f32.mrf.mxu0
        %859 = vmatprep.mubr.f32.mxu0 0.0
        %v860 = vand.u32 %v211, 4294901760
        %861 = vmatmul.mubr.f32.gmra.mxu0 %v860
        %v862 = vpop.f32.mrf.mxu0
        %v863 = vadd.f32 %v446, %v862
        %v864 = vpop.f32.mrf.mxu0
        %865 = vmatprep.mubr.f32.mxu0 0.0
        %v866 = vand.u32 %v212, 4294901760
        %867 = vmatmul.mubr.f32.gmra.mxu0 %v866
        %v868 = vpop.f32.mrf.mxu0
        %v869 = vadd.f32 %v456, %v868
        %v870 = vpop.f32.mrf.mxu0
        %871 = vmatprep.mubr.f32.mxu0 0.0
        %v872 = vand.u32 %v213, 4294901760
        %873 = vmatmul.mubr.f32.gmra.mxu0 %v872
        %v874 = vpop.f32.mrf.mxu0
        %v875 = vadd.f32 %v466, %v874
        %v876 = vpop.f32.mrf.mxu0
        %877 = vmatprep.mubr.f32.mxu0 0.0
        %v878 = vand.u32 %v214, 4294901760
        %879 = vmatmul.mubr.f32.gmra.mxu0 %v878
        %v880 = vpop.f32.mrf.mxu0
        %v881 = vadd.f32 %v476, %v880
        %v882 = vpop.f32.mrf.mxu0
        %883 = vmatprep.mubr.f32.mxu0 0.0
        %v884 = vand.u32 %v215, 4294901760
        %885 = vmatmul.mubr.f32.gmra.mxu0 %v884
        %v886 = vpop.f32.mrf.mxu0
        %v887 = vadd.f32 %v486, %v886
        %v888 = vpop.f32.mrf.mxu0
        %889 = vmatprep.mubr.f32.mxu0 0.0
        %v890 = vand.u32 %v216, 4294901760
        %891 = vmatmul.mubr.f32.gmra.mxu0 %v890
        %v892 = vpop.f32.mrf.mxu0
        %v893 = vadd.f32 %v496, %v892
        %v894 = vpop.f32.mrf.mxu0
        %895 = vmatprep.mubr.f32.mxu0 0.0
        %v896 = vand.u32 %v217, 4294901760
        %897 = vmatmul.mubr.f32.gmra.mxu0 %v896
        %v898 = vpop.f32.mrf.mxu0
        %v899 = vadd.f32 %v506, %v898
        %v900 = vpop.f32.mrf.mxu0
        %901 = vmatprep.mubr.f32.mxu0 0.0
        %v902 = vand.u32 %v218, 4294901760
        %903 = vmatmul.mubr.f32.gmra.mxu0 %v902
        %v904 = vpop.f32.mrf.mxu0
        %v905 = vadd.f32 %v516, %v904
        %v906 = vpop.f32.mrf.mxu0
        %907 = vmatprep.mubr.f32.mxu0 0.0
        %v908 = vand.u32 %v219, 4294901760
        %909 = vmatmul.mubr.f32.gmra.mxu0 %v908
        %v910 = vpop.f32.mrf.mxu0
        %v911 = vadd.f32 %v526, %v910
        %v912 = vpop.f32.mrf.mxu0
        %913 = vmatprep.mubr.f32.mxu0 0.0
        %v914 = vand.u32 %v220, 4294901760
        %915 = vmatmul.mubr.f32.gmra.mxu0 %v914
        %v916 = vpop.f32.mrf.mxu0
        %v917 = vadd.f32 %v536, %v916
        %v918 = vpop.f32.mrf.mxu0
        %919 = vmatprep.mubr.f32.mxu0 0.0
        %v920 = vand.u32 %v221, 4294901760
        %921 = vmatmul.mubr.f32.gmra.mxu0 %v920
        %v922 = vpop.f32.mrf.mxu0
        %v923 = vadd.f32 %v546, %v922
        %v924 = vpop.f32.mrf.mxu0
        %925 = vmatprep.mubr.f32.mxu0 0.0
        %v926 = vand.u32 %v222, 4294901760
        %927 = vmatmul.mubr.f32.gmra.mxu0 %v926
        %v928 = vpop.f32.mrf.mxu0
        %v929 = vadd.f32 %v556, %v928
        %v930 = vpop.f32.mrf.mxu0
        %931 = vmatprep.mubr.f32.mxu0 0.0
        %v932 = vand.u32 %v223, 4294901760
        %933 = vmatmul.mubr.f32.gmra.mxu0 %v932
        %v934 = vpop.f32.mrf.mxu0
        %v935 = vadd.f32 %v566, %v934
        %v936 = vpop.f32.mrf.mxu0
        %937 = vmatprep.mubr.f32.mxu0 0.0
        %v938 = vand.u32 %v224, 4294901760
        %939 = vmatmul.mubr.f32.gmra.mxu0 %v938
        %v940 = vpop.f32.mrf.mxu0
        %v941 = vadd.f32 %v576, %v940
        %v942 = vpop.f32.mrf.mxu0
        %943 = vmatprep.mubr.f32.mxu0 0.0
        %v944 = vand.u32 %v225, 4294901760
        %945 = vmatmul.mubr.f32.gmra.mxu0 %v944
        %v946 = vpop.f32.mrf.mxu0
        %v947 = vadd.f32 %v586, %v946
        %v948 = vpop.f32.mrf.mxu0
        %949 = vmatprep.mubr.f32.mxu0 0.0
        %v950 = vand.u32 %v226, 4294901760
        %951 = vmatmul.mubr.f32.gmra.mxu0 %v950
        %v952 = vpop.f32.mrf.mxu0
        %v953 = vadd.f32 %v596, %v952
        %v954 = vpop.f32.mrf.mxu0
        %955 = vmatprep.mubr.f32.mxu0 0.0
        %v956 = vand.u32 %v227, 4294901760
        %957 = vmatmul.mubr.f32.gmra.mxu0 %v956
        %v958 = vpop.f32.mrf.mxu0
        %v959 = vadd.f32 %v606, %v958
        %v960 = vpop.f32.mrf.mxu0
        %961 = vmatprep.mubr.f32.mxu0 0.0
        %v962 = vand.u32 %v228, 4294901760
        %963 = vmatmul.mubr.f32.gmra.mxu0 %v962
        %v964 = vpop.f32.mrf.mxu0
        %v965 = vadd.f32 %v616, %v964
        %v966 = vpop.f32.mrf.mxu0
        %967 = vmatprep.mubr.f32.mxu0 0.0
        %v968 = vand.u32 %v229, 4294901760
        %969 = vmatmul.mubr.f32.gmra.mxu0 %v968
        %v970 = vpop.f32.mrf.mxu0
        %v971 = vadd.f32 %v626, %v970
        %v972 = vpop.f32.mrf.mxu0
        %973 = vmatprep.mubr.f32.mxu0 0.0
        %v974 = vand.u32 %v230, 4294901760
        %975 = vmatmul.mubr.f32.gmra.mxu0 %v974
        %v976 = vpop.f32.mrf.mxu0
        %v977 = vadd.f32 %v636, %v976
        %v978 = vpop.f32.mrf.mxu0
        %979 = vmatprep.mubr.f32.mxu0 0.0
        %v980 = vand.u32 %v231, 4294901760
        %981 = vmatmul.mubr.f32.gmra.mxu0 %v980
        %v982 = vpop.f32.mrf.mxu0
        %v983 = vadd.f32 %v646, %v982
        %v984 = vpop.f32.mrf.mxu0
        %985 = vdwg.mxu0
        %986 = vmatprep.subr.mxu0 0.0
        %v987 = vand.u32 %v247, 4294901760
        %v988 = vsub.f32 %v247, %v987
        %989 = vmatpush1.msra.mxu0 %v988
        %990 = vmatprep.subr.mxu0 0.0
        %v991 = vand.u32 %v246, 4294901760
        %v992 = vsub.f32 %v246, %v991
        %993 = vmatpush1.msra.mxu0 %v992
        %994 = vmatprep.subr.mxu0 0.0
        %v995 = vand.u32 %v245, 4294901760
        %v996 = vsub.f32 %v245, %v995
        %997 = vmatpush1.msra.mxu0 %v996
        %998 = vmatprep.subr.mxu0 0.0
        %v999 = vand.u32 %v244, 4294901760
        %v1000 = vsub.f32 %v244, %v999
        %1001 = vmatpush1.msra.mxu0 %v1000
        %1002 = vmatprep.subr.mxu0 0.0
        %v1003 = vand.u32 %v243, 4294901760
        %v1004 = vsub.f32 %v243, %v1003
        %1005 = vmatpush1.msra.mxu0 %v1004
        %1006 = vmatprep.subr.mxu0 0.0
        %v1007 = vand.u32 %v242, 4294901760
        %v1008 = vsub.f32 %v242, %v1007
        %1009 = vmatpush1.msra.mxu0 %v1008
        %1010 = vmatprep.subr.mxu0 0.0
        %v1011 = vand.u32 %v241, 4294901760
        %v1012 = vsub.f32 %v241, %v1011
        %1013 = vmatpush1.msra.mxu0 %v1012
        %1014 = vmatprep.subr.mxu0 0.0
        %v1015 = vand.u32 %v240, 4294901760
        %v1016 = vsub.f32 %v240, %v1015
        %1017 = vmatpush1.msra.mxu0 %v1016
        %1018 = vmatprep.subr.mxu0 0.0
        %v1019 = vand.u32 %v239, 4294901760
        %v1020 = vsub.f32 %v239, %v1019
        %1021 = vmatpush1.msra.mxu0 %v1020
        %1022 = vmatprep.subr.mxu0 0.0
        %v1023 = vand.u32 %v238, 4294901760
        %v1024 = vsub.f32 %v238, %v1023
        %1025 = vmatpush1.msra.mxu0 %v1024
        %1026 = vmatprep.subr.mxu0 0.0
        %v1027 = vand.u32 %v237, 4294901760
        %v1028 = vsub.f32 %v237, %v1027
        %1029 = vmatpush1.msra.mxu0 %v1028
        %1030 = vmatprep.subr.mxu0 0.0
        %v1031 = vand.u32 %v236, 4294901760
        %v1032 = vsub.f32 %v236, %v1031
        %1033 = vmatpush1.msra.mxu0 %v1032
        %1034 = vmatprep.subr.mxu0 0.0
        %v1035 = vand.u32 %v235, 4294901760
        %v1036 = vsub.f32 %v235, %v1035
        %1037 = vmatpush1.msra.mxu0 %v1036
        %1038 = vmatprep.subr.mxu0 0.0
        %v1039 = vand.u32 %v234, 4294901760
        %v1040 = vsub.f32 %v234, %v1039
        %1041 = vmatpush1.msra.mxu0 %v1040
        %1042 = vmatprep.subr.mxu0 0.0
        %v1043 = vand.u32 %v233, 4294901760
        %v1044 = vsub.f32 %v233, %v1043
        %1045 = vmatpush1.msra.mxu0 %v1044
        %1046 = vmatprep.subr.mxu0 0.0
        %v1047 = vand.u32 %v232, 4294901760
        %v1048 = vsub.f32 %v232, %v1047
        %1049 = vmatpush1.msra.mxu0 %v1048
        %1050 = vmatprep.subr.mxu0 0.0
        %1051 = vmatpush2.msra.mxu0 0.0
        %1052 = vmatprep.subr.mxu0 0.0
        %1053 = vmatpush2.msra.mxu0 0.0
        %1054 = vmatprep.subr.mxu0 0.0
        %1055 = vmatpush2.msra.mxu0 0.0
        %1056 = vmatprep.subr.mxu0 0.0
        %1057 = vmatpush2.msra.mxu0 0.0
        %1058 = vmatprep.subr.mxu0 0.0
        %1059 = vmatpush2.msra.mxu0 0.0
        %1060 = vmatprep.subr.mxu0 0.0
        %1061 = vmatpush2.msra.mxu0 0.0
        %1062 = vmatprep.subr.mxu0 0.0
        %1063 = vmatpush2.msra.mxu0 0.0
        %1064 = vmatprep.subr.mxu0 0.0
        %1065 = vmatpush2.msra.mxu0 0.0
        %1066 = vmatprep.subr.mxu0 0.0
        %1067 = vmatpush2.msra.mxu0 0.0
        %1068 = vmatprep.subr.mxu0 0.0
        %1069 = vmatpush2.msra.mxu0 0.0
        %1070 = vmatprep.subr.mxu0 0.0
        %1071 = vmatpush2.msra.mxu0 0.0
        %1072 = vmatprep.subr.mxu0 0.0
        %1073 = vmatpush2.msra.mxu0 0.0
        %1074 = vmatprep.subr.mxu0 0.0
        %1075 = vmatpush2.msra.mxu0 0.0
        %1076 = vmatprep.subr.mxu0 0.0
        %1077 = vmatpush2.msra.mxu0 0.0
        %1078 = vmatprep.subr.mxu0 0.0
        %1079 = vmatpush2.msra.mxu0 0.0
        %1080 = vmatprep.subr.mxu0 0.0
        %1081 = vmatpush2.msra.mxu0 0.0
        %1082 = vmatprep.mubr.f32.mxu0 0.0
        %v1083 = vand.u32 %v200, 4294901760
        %v1084 = vsub.f32 %v200, %v1083
        %1085 = vmatmul.mubr.f32.gmra.mxu0 %v1084
        %v1086 = vpop.f32.mrf.mxu0
        %v1087 = vadd.f32 %v797, %v1086
        %v1088 = vpop.f32.mrf.mxu0
        %1089 = vmatprep.mubr.f32.mxu0 0.0
        %v1090 = vand.u32 %v201, 4294901760
        %v1091 = vsub.f32 %v201, %v1090
        %1092 = vmatmul.mubr.f32.gmra.mxu0 %v1091
        %v1093 = vpop.f32.mrf.mxu0
        %v1094 = vadd.f32 %v803, %v1093
        %v1095 = vpop.f32.mrf.mxu0
        %1096 = vmatprep.mubr.f32.mxu0 0.0
        %v1097 = vand.u32 %v202, 4294901760
        %v1098 = vsub.f32 %v202, %v1097
        %1099 = vmatmul.mubr.f32.gmra.mxu0 %v1098
        %v1100 = vpop.f32.mrf.mxu0
        %v1101 = vadd.f32 %v809, %v1100
        %v1102 = vpop.f32.mrf.mxu0
        %1103 = vmatprep.mubr.f32.mxu0 0.0
        %v1104 = vand.u32 %v203, 4294901760
        %v1105 = vsub.f32 %v203, %v1104
        %1106 = vmatmul.mubr.f32.gmra.mxu0 %v1105
        %v1107 = vpop.f32.mrf.mxu0
        %v1108 = vadd.f32 %v815, %v1107
        %v1109 = vpop.f32.mrf.mxu0
        %1110 = vmatprep.mubr.f32.mxu0 0.0
        %v1111 = vand.u32 %v204, 4294901760
        %v1112 = vsub.f32 %v204, %v1111
        %1113 = vmatmul.mubr.f32.gmra.mxu0 %v1112
        %v1114 = vpop.f32.mrf.mxu0
        %v1115 = vadd.f32 %v821, %v1114
        %v1116 = vpop.f32.mrf.mxu0
        %1117 = vmatprep.mubr.f32.mxu0 0.0
        %v1118 = vand.u32 %v205, 4294901760
        %v1119 = vsub.f32 %v205, %v1118
        %1120 = vmatmul.mubr.f32.gmra.mxu0 %v1119
        %v1121 = vpop.f32.mrf.mxu0
        %v1122 = vadd.f32 %v827, %v1121
        %v1123 = vpop.f32.mrf.mxu0
        %1124 = vmatprep.mubr.f32.mxu0 0.0
        %v1125 = vand.u32 %v206, 4294901760
        %v1126 = vsub.f32 %v206, %v1125
        %1127 = vmatmul.mubr.f32.gmra.mxu0 %v1126
        %v1128 = vpop.f32.mrf.mxu0
        %v1129 = vadd.f32 %v833, %v1128
        %v1130 = vpop.f32.mrf.mxu0
        %1131 = vmatprep.mubr.f32.mxu0 0.0
        %v1132 = vand.u32 %v207, 4294901760
        %v1133 = vsub.f32 %v207, %v1132
        %1134 = vmatmul.mubr.f32.gmra.mxu0 %v1133
        %v1135 = vpop.f32.mrf.mxu0
        %v1136 = vadd.f32 %v839, %v1135
        %v1137 = vpop.f32.mrf.mxu0
        %1138 = vmatprep.mubr.f32.mxu0 0.0
        %v1139 = vand.u32 %v208, 4294901760
        %v1140 = vsub.f32 %v208, %v1139
        %1141 = vmatmul.mubr.f32.gmra.mxu0 %v1140
        %v1142 = vpop.f32.mrf.mxu0
        %v1143 = vadd.f32 %v845, %v1142
        %v1144 = vpop.f32.mrf.mxu0
        %1145 = vmatprep.mubr.f32.mxu0 0.0
        %v1146 = vand.u32 %v209, 4294901760
        %v1147 = vsub.f32 %v209, %v1146
        %1148 = vmatmul.mubr.f32.gmra.mxu0 %v1147
        %v1149 = vpop.f32.mrf.mxu0
        %v1150 = vadd.f32 %v851, %v1149
        %v1151 = vpop.f32.mrf.mxu0
        %1152 = vmatprep.mubr.f32.mxu0 0.0
        %v1153 = vand.u32 %v210, 4294901760
        %v1154 = vsub.f32 %v210, %v1153
        %1155 = vmatmul.mubr.f32.gmra.mxu0 %v1154
        %v1156 = vpop.f32.mrf.mxu0
        %v1157 = vadd.f32 %v857, %v1156
        %v1158 = vpop.f32.mrf.mxu0
        %1159 = vmatprep.mubr.f32.mxu0 0.0
        %v1160 = vand.u32 %v211, 4294901760
        %v1161 = vsub.f32 %v211, %v1160
        %1162 = vmatmul.mubr.f32.gmra.mxu0 %v1161
        %v1163 = vpop.f32.mrf.mxu0
        %v1164 = vadd.f32 %v863, %v1163
        %v1165 = vpop.f32.mrf.mxu0
        %1166 = vmatprep.mubr.f32.mxu0 0.0
        %v1167 = vand.u32 %v212, 4294901760
        %v1168 = vsub.f32 %v212, %v1167
        %1169 = vmatmul.mubr.f32.gmra.mxu0 %v1168
        %v1170 = vpop.f32.mrf.mxu0
        %v1171 = vadd.f32 %v869, %v1170
        %v1172 = vpop.f32.mrf.mxu0
        %1173 = vmatprep.mubr.f32.mxu0 0.0
        %v1174 = vand.u32 %v213, 4294901760
        %v1175 = vsub.f32 %v213, %v1174
        %1176 = vmatmul.mubr.f32.gmra.mxu0 %v1175
        %v1177 = vpop.f32.mrf.mxu0
        %v1178 = vadd.f32 %v875, %v1177
        %v1179 = vpop.f32.mrf.mxu0
        %1180 = vmatprep.mubr.f32.mxu0 0.0
        %v1181 = vand.u32 %v214, 4294901760
        %v1182 = vsub.f32 %v214, %v1181
        %1183 = vmatmul.mubr.f32.gmra.mxu0 %v1182
        %v1184 = vpop.f32.mrf.mxu0
        %v1185 = vadd.f32 %v881, %v1184
        %v1186 = vpop.f32.mrf.mxu0
        %1187 = vmatprep.mubr.f32.mxu0 0.0
        %v1188 = vand.u32 %v215, 4294901760
        %v1189 = vsub.f32 %v215, %v1188
        %1190 = vmatmul.mubr.f32.gmra.mxu0 %v1189
        %v1191 = vpop.f32.mrf.mxu0
        %v1192 = vadd.f32 %v887, %v1191
        %v1193 = vpop.f32.mrf.mxu0
        %1194 = vmatprep.mubr.f32.mxu0 0.0
        %v1195 = vand.u32 %v216, 4294901760
        %v1196 = vsub.f32 %v216, %v1195
        %1197 = vmatmul.mubr.f32.gmra.mxu0 %v1196
        %v1198 = vpop.f32.mrf.mxu0
        %v1199 = vadd.f32 %v893, %v1198
        %v1200 = vpop.f32.mrf.mxu0
        %1201 = vmatprep.mubr.f32.mxu0 0.0
        %v1202 = vand.u32 %v217, 4294901760
        %v1203 = vsub.f32 %v217, %v1202
        %1204 = vmatmul.mubr.f32.gmra.mxu0 %v1203
        %v1205 = vpop.f32.mrf.mxu0
        %v1206 = vadd.f32 %v899, %v1205
        %v1207 = vpop.f32.mrf.mxu0
        %1208 = vmatprep.mubr.f32.mxu0 0.0
        %v1209 = vand.u32 %v218, 4294901760
        %v1210 = vsub.f32 %v218, %v1209
        %1211 = vmatmul.mubr.f32.gmra.mxu0 %v1210
        %v1212 = vpop.f32.mrf.mxu0
        %v1213 = vadd.f32 %v905, %v1212
        %v1214 = vpop.f32.mrf.mxu0
        %1215 = vmatprep.mubr.f32.mxu0 0.0
        %v1216 = vand.u32 %v219, 4294901760
        %v1217 = vsub.f32 %v219, %v1216
        %1218 = vmatmul.mubr.f32.gmra.mxu0 %v1217
        %v1219 = vpop.f32.mrf.mxu0
        %v1220 = vadd.f32 %v911, %v1219
        %v1221 = vpop.f32.mrf.mxu0
        %1222 = vmatprep.mubr.f32.mxu0 0.0
        %v1223 = vand.u32 %v220, 4294901760
        %v1224 = vsub.f32 %v220, %v1223
        %1225 = vmatmul.mubr.f32.gmra.mxu0 %v1224
        %v1226 = vpop.f32.mrf.mxu0
        %v1227 = vadd.f32 %v917, %v1226
        %v1228 = vpop.f32.mrf.mxu0
        %1229 = vmatprep.mubr.f32.mxu0 0.0
        %v1230 = vand.u32 %v221, 4294901760
        %v1231 = vsub.f32 %v221, %v1230
        %1232 = vmatmul.mubr.f32.gmra.mxu0 %v1231
        %v1233 = vpop.f32.mrf.mxu0
        %v1234 = vadd.f32 %v923, %v1233
        %v1235 = vpop.f32.mrf.mxu0
        %1236 = vmatprep.mubr.f32.mxu0 0.0
        %v1237 = vand.u32 %v222, 4294901760
        %v1238 = vsub.f32 %v222, %v1237
        %1239 = vmatmul.mubr.f32.gmra.mxu0 %v1238
        %v1240 = vpop.f32.mrf.mxu0
        %v1241 = vadd.f32 %v929, %v1240
        %v1242 = vpop.f32.mrf.mxu0
        %1243 = vmatprep.mubr.f32.mxu0 0.0
        %v1244 = vand.u32 %v223, 4294901760
        %v1245 = vsub.f32 %v223, %v1244
        %1246 = vmatmul.mubr.f32.gmra.mxu0 %v1245
        %v1247 = vpop.f32.mrf.mxu0
        %v1248 = vadd.f32 %v935, %v1247
        %v1249 = vpop.f32.mrf.mxu0
        %1250 = vmatprep.mubr.f32.mxu0 0.0
        %v1251 = vand.u32 %v224, 4294901760
        %v1252 = vsub.f32 %v224, %v1251
        %1253 = vmatmul.mubr.f32.gmra.mxu0 %v1252
        %v1254 = vpop.f32.mrf.mxu0
        %v1255 = vadd.f32 %v941, %v1254
        %v1256 = vpop.f32.mrf.mxu0
        %1257 = vmatprep.mubr.f32.mxu0 0.0
        %v1258 = vand.u32 %v225, 4294901760
        %v1259 = vsub.f32 %v225, %v1258
        %1260 = vmatmul.mubr.f32.gmra.mxu0 %v1259
        %v1261 = vpop.f32.mrf.mxu0
        %v1262 = vadd.f32 %v947, %v1261
        %v1263 = vpop.f32.mrf.mxu0
        %1264 = vmatprep.mubr.f32.mxu0 0.0
        %v1265 = vand.u32 %v226, 4294901760
        %v1266 = vsub.f32 %v226, %v1265
        %1267 = vmatmul.mubr.f32.gmra.mxu0 %v1266
        %v1268 = vpop.f32.mrf.mxu0
        %v1269 = vadd.f32 %v953, %v1268
        %v1270 = vpop.f32.mrf.mxu0
        %1271 = vmatprep.mubr.f32.mxu0 0.0
        %v1272 = vand.u32 %v227, 4294901760
        %v1273 = vsub.f32 %v227, %v1272
        %1274 = vmatmul.mubr.f32.gmra.mxu0 %v1273
        %v1275 = vpop.f32.mrf.mxu0
        %v1276 = vadd.f32 %v959, %v1275
        %v1277 = vpop.f32.mrf.mxu0
        %1278 = vmatprep.mubr.f32.mxu0 0.0
        %v1279 = vand.u32 %v228, 4294901760
        %v1280 = vsub.f32 %v228, %v1279
        %1281 = vmatmul.mubr.f32.gmra.mxu0 %v1280
        %v1282 = vpop.f32.mrf.mxu0
        %v1283 = vadd.f32 %v965, %v1282
        %v1284 = vpop.f32.mrf.mxu0
        %1285 = vmatprep.mubr.f32.mxu0 0.0
        %v1286 = vand.u32 %v229, 4294901760
        %v1287 = vsub.f32 %v229, %v1286
        %1288 = vmatmul.mubr.f32.gmra.mxu0 %v1287
        %v1289 = vpop.f32.mrf.mxu0
        %v1290 = vadd.f32 %v971, %v1289
        %v1291 = vpop.f32.mrf.mxu0
        %1292 = vmatprep.mubr.f32.mxu0 0.0
        %v1293 = vand.u32 %v230, 4294901760
        %v1294 = vsub.f32 %v230, %v1293
        %1295 = vmatmul.mubr.f32.gmra.mxu0 %v1294
        %v1296 = vpop.f32.mrf.mxu0
        %v1297 = vadd.f32 %v977, %v1296
        %v1298 = vpop.f32.mrf.mxu0
        %1299 = vmatprep.mubr.f32.mxu0 0.0
        %v1300 = vand.u32 %v231, 4294901760
        %v1301 = vsub.f32 %v231, %v1300
        %1302 = vmatmul.mubr.f32.gmra.mxu0 %v1301
        %v1303 = vpop.f32.mrf.mxu0
        %v1304 = vadd.f32 %v983, %v1303
        %v1305 = vpop.f32.mrf.mxu0
        %1306 = vdwg.mxu0
        %1307 = vmatprep.subr.mxu0 0.0
        %v1308 = vand.u32 %v247, 4294901760
        %1309 = vmatpush1.msra.mxu0 %v1308
        %1310 = vmatprep.subr.mxu0 0.0
        %v1311 = vand.u32 %v246, 4294901760
        %1312 = vmatpush1.msra.mxu0 %v1311
        %1313 = vmatprep.subr.mxu0 0.0
        %v1314 = vand.u32 %v245, 4294901760
        %1315 = vmatpush1.msra.mxu0 %v1314
        %1316 = vmatprep.subr.mxu0 0.0
        %v1317 = vand.u32 %v244, 4294901760
        %1318 = vmatpush1.msra.mxu0 %v1317
        %1319 = vmatprep.subr.mxu0 0.0
        %v1320 = vand.u32 %v243, 4294901760
        %1321 = vmatpush1.msra.mxu0 %v1320
        %1322 = vmatprep.subr.mxu0 0.0
        %v1323 = vand.u32 %v242, 4294901760
        %1324 = vmatpush1.msra.mxu0 %v1323
        %1325 = vmatprep.subr.mxu0 0.0
        %v1326 = vand.u32 %v241, 4294901760
        %1327 = vmatpush1.msra.mxu0 %v1326
        %1328 = vmatprep.subr.mxu0 0.0
        %v1329 = vand.u32 %v240, 4294901760
        %1330 = vmatpush1.msra.mxu0 %v1329
        %1331 = vmatprep.subr.mxu0 0.0
        %v1332 = vand.u32 %v239, 4294901760
        %1333 = vmatpush1.msra.mxu0 %v1332
        %1334 = vmatprep.subr.mxu0 0.0
        %v1335 = vand.u32 %v238, 4294901760
        %1336 = vmatpush1.msra.mxu0 %v1335
        %1337 = vmatprep.subr.mxu0 0.0
        %v1338 = vand.u32 %v237, 4294901760
        %1339 = vmatpush1.msra.mxu0 %v1338
        %1340 = vmatprep.subr.mxu0 0.0
        %v1341 = vand.u32 %v236, 4294901760
        %1342 = vmatpush1.msra.mxu0 %v1341
        %1343 = vmatprep.subr.mxu0 0.0
        %v1344 = vand.u32 %v235, 4294901760
        %1345 = vmatpush1.msra.mxu0 %v1344
        %1346 = vmatprep.subr.mxu0 0.0
        %v1347 = vand.u32 %v234, 4294901760
        %1348 = vmatpush1.msra.mxu0 %v1347
        %1349 = vmatprep.subr.mxu0 0.0
        %v1350 = vand.u32 %v233, 4294901760
        %1351 = vmatpush1.msra.mxu0 %v1350
        %1352 = vmatprep.subr.mxu0 0.0
        %v1353 = vand.u32 %v232, 4294901760
        %1354 = vmatpush1.msra.mxu0 %v1353
        %1355 = vmatprep.subr.mxu0 0.0
        %1356 = vmatpush2.msra.mxu0 0.0
        %1357 = vmatprep.subr.mxu0 0.0
        %1358 = vmatpush2.msra.mxu0 0.0
        %1359 = vmatprep.subr.mxu0 0.0
        %1360 = vmatpush2.msra.mxu0 0.0
        %1361 = vmatprep.subr.mxu0 0.0
        %1362 = vmatpush2.msra.mxu0 0.0
        %1363 = vmatprep.subr.mxu0 0.0
        %1364 = vmatpush2.msra.mxu0 0.0
        %1365 = vmatprep.subr.mxu0 0.0
        %1366 = vmatpush2.msra.mxu0 0.0
        %1367 = vmatprep.subr.mxu0 0.0
        %1368 = vmatpush2.msra.mxu0 0.0
        %1369 = vmatprep.subr.mxu0 0.0
        %1370 = vmatpush2.msra.mxu0 0.0
        %1371 = vmatprep.subr.mxu0 0.0
        %1372 = vmatpush2.msra.mxu0 0.0
        %1373 = vmatprep.subr.mxu0 0.0
        %1374 = vmatpush2.msra.mxu0 0.0
        %1375 = vmatprep.subr.mxu0 0.0
        %1376 = vmatpush2.msra.mxu0 0.0
        %1377 = vmatprep.subr.mxu0 0.0
        %1378 = vmatpush2.msra.mxu0 0.0
        %1379 = vmatprep.subr.mxu0 0.0
        %1380 = vmatpush2.msra.mxu0 0.0
        %1381 = vmatprep.subr.mxu0 0.0
        %1382 = vmatpush2.msra.mxu0 0.0
        %1383 = vmatprep.subr.mxu0 0.0
        %1384 = vmatpush2.msra.mxu0 0.0
        %1385 = vmatprep.subr.mxu0 0.0
        %1386 = vmatpush2.msra.mxu0 0.0
        %1387 = vmatprep.mubr.f32.mxu0 0.0
        %v1388 = vand.u32 %v200, 4294901760
        %v1389 = vsub.f32 %v200, %v1388
        %v1390 = vand.u32 %v1389, 4294901760
        %1391 = vmatmul.mubr.f32.gmra.mxu0 %v1390
        %v1392 = vpop.f32.mrf.mxu0
        %v1393 = vadd.f32 %v1087, %v1392
        %v1394 = vpop.f32.mrf.mxu0
        %1395 = vmatprep.mubr.f32.mxu0 0.0
        %v1396 = vand.u32 %v201, 4294901760
        %v1397 = vsub.f32 %v201, %v1396
        %v1398 = vand.u32 %v1397, 4294901760
        %1399 = vmatmul.mubr.f32.gmra.mxu0 %v1398
        %v1400 = vpop.f32.mrf.mxu0
        %v1401 = vadd.f32 %v1094, %v1400
        %v1402 = vpop.f32.mrf.mxu0
        %1403 = vmatprep.mubr.f32.mxu0 0.0
        %v1404 = vand.u32 %v202, 4294901760
        %v1405 = vsub.f32 %v202, %v1404
        %v1406 = vand.u32 %v1405, 4294901760
        %1407 = vmatmul.mubr.f32.gmra.mxu0 %v1406
        %v1408 = vpop.f32.mrf.mxu0
        %v1409 = vadd.f32 %v1101, %v1408
        %v1410 = vpop.f32.mrf.mxu0
        %1411 = vmatprep.mubr.f32.mxu0 0.0
        %v1412 = vand.u32 %v203, 4294901760
        %v1413 = vsub.f32 %v203, %v1412
        %v1414 = vand.u32 %v1413, 4294901760
        %1415 = vmatmul.mubr.f32.gmra.mxu0 %v1414
        %v1416 = vpop.f32.mrf.mxu0
        %v1417 = vadd.f32 %v1108, %v1416
        %v1418 = vpop.f32.mrf.mxu0
        %1419 = vmatprep.mubr.f32.mxu0 0.0
        %v1420 = vand.u32 %v204, 4294901760
        %v1421 = vsub.f32 %v204, %v1420
        %v1422 = vand.u32 %v1421, 4294901760
        %1423 = vmatmul.mubr.f32.gmra.mxu0 %v1422
        %v1424 = vpop.f32.mrf.mxu0
        %v1425 = vadd.f32 %v1115, %v1424
        %v1426 = vpop.f32.mrf.mxu0
        %1427 = vmatprep.mubr.f32.mxu0 0.0
        %v1428 = vand.u32 %v205, 4294901760
        %v1429 = vsub.f32 %v205, %v1428
        %v1430 = vand.u32 %v1429, 4294901760
        %1431 = vmatmul.mubr.f32.gmra.mxu0 %v1430
        %v1432 = vpop.f32.mrf.mxu0
        %v1433 = vadd.f32 %v1122, %v1432
        %v1434 = vpop.f32.mrf.mxu0
        %1435 = vmatprep.mubr.f32.mxu0 0.0
        %v1436 = vand.u32 %v206, 4294901760
        %v1437 = vsub.f32 %v206, %v1436
        %v1438 = vand.u32 %v1437, 4294901760
        %1439 = vmatmul.mubr.f32.gmra.mxu0 %v1438
        %v1440 = vpop.f32.mrf.mxu0
        %v1441 = vadd.f32 %v1129, %v1440
        %v1442 = vpop.f32.mrf.mxu0
        %1443 = vmatprep.mubr.f32.mxu0 0.0
        %v1444 = vand.u32 %v207, 4294901760
        %v1445 = vsub.f32 %v207, %v1444
        %v1446 = vand.u32 %v1445, 4294901760
        %1447 = vmatmul.mubr.f32.gmra.mxu0 %v1446
        %v1448 = vpop.f32.mrf.mxu0
        %v1449 = vadd.f32 %v1136, %v1448
        %v1450 = vpop.f32.mrf.mxu0
        %1451 = vmatprep.mubr.f32.mxu0 0.0
        %v1452 = vand.u32 %v208, 4294901760
        %v1453 = vsub.f32 %v208, %v1452
        %v1454 = vand.u32 %v1453, 4294901760
        %1455 = vmatmul.mubr.f32.gmra.mxu0 %v1454
        %v1456 = vpop.f32.mrf.mxu0
        %v1457 = vadd.f32 %v1143, %v1456
        %v1458 = vpop.f32.mrf.mxu0
        %1459 = vmatprep.mubr.f32.mxu0 0.0
        %v1460 = vand.u32 %v209, 4294901760
        %v1461 = vsub.f32 %v209, %v1460
        %v1462 = vand.u32 %v1461, 4294901760
        %1463 = vmatmul.mubr.f32.gmra.mxu0 %v1462
        %v1464 = vpop.f32.mrf.mxu0
        %v1465 = vadd.f32 %v1150, %v1464
        %v1466 = vpop.f32.mrf.mxu0
        %1467 = vmatprep.mubr.f32.mxu0 0.0
        %v1468 = vand.u32 %v210, 4294901760
        %v1469 = vsub.f32 %v210, %v1468
        %v1470 = vand.u32 %v1469, 4294901760
        %1471 = vmatmul.mubr.f32.gmra.mxu0 %v1470
        %v1472 = vpop.f32.mrf.mxu0
        %v1473 = vadd.f32 %v1157, %v1472
        %v1474 = vpop.f32.mrf.mxu0
        %1475 = vmatprep.mubr.f32.mxu0 0.0
        %v1476 = vand.u32 %v211, 4294901760
        %v1477 = vsub.f32 %v211, %v1476
        %v1478 = vand.u32 %v1477, 4294901760
        %1479 = vmatmul.mubr.f32.gmra.mxu0 %v1478
        %v1480 = vpop.f32.mrf.mxu0
        %v1481 = vadd.f32 %v1164, %v1480
        %v1482 = vpop.f32.mrf.mxu0
        %1483 = vmatprep.mubr.f32.mxu0 0.0
        %v1484 = vand.u32 %v212, 4294901760
        %v1485 = vsub.f32 %v212, %v1484
        %v1486 = vand.u32 %v1485, 4294901760
        %1487 = vmatmul.mubr.f32.gmra.mxu0 %v1486
        %v1488 = vpop.f32.mrf.mxu0
        %v1489 = vadd.f32 %v1171, %v1488
        %v1490 = vpop.f32.mrf.mxu0
        %1491 = vmatprep.mubr.f32.mxu0 0.0
        %v1492 = vand.u32 %v213, 4294901760
        %v1493 = vsub.f32 %v213, %v1492
        %v1494 = vand.u32 %v1493, 4294901760
        %1495 = vmatmul.mubr.f32.gmra.mxu0 %v1494
        %v1496 = vpop.f32.mrf.mxu0
        %v1497 = vadd.f32 %v1178, %v1496
        %v1498 = vpop.f32.mrf.mxu0
        %1499 = vmatprep.mubr.f32.mxu0 0.0
        %v1500 = vand.u32 %v214, 4294901760
        %v1501 = vsub.f32 %v214, %v1500
        %v1502 = vand.u32 %v1501, 4294901760
        %1503 = vmatmul.mubr.f32.gmra.mxu0 %v1502
        %v1504 = vpop.f32.mrf.mxu0
        %v1505 = vadd.f32 %v1185, %v1504
        %v1506 = vpop.f32.mrf.mxu0
        %1507 = vmatprep.mubr.f32.mxu0 0.0
        %v1508 = vand.u32 %v215, 4294901760
        %v1509 = vsub.f32 %v215, %v1508
        %v1510 = vand.u32 %v1509, 4294901760
        %1511 = vmatmul.mubr.f32.gmra.mxu0 %v1510
        %v1512 = vpop.f32.mrf.mxu0
        %v1513 = vadd.f32 %v1192, %v1512
        %v1514 = vpop.f32.mrf.mxu0
        %1515 = vmatprep.mubr.f32.mxu0 0.0
        %v1516 = vand.u32 %v216, 4294901760
        %v1517 = vsub.f32 %v216, %v1516
        %v1518 = vand.u32 %v1517, 4294901760
        %1519 = vmatmul.mubr.f32.gmra.mxu0 %v1518
        %v1520 = vpop.f32.mrf.mxu0
        %v1521 = vadd.f32 %v1199, %v1520
        %v1522 = vpop.f32.mrf.mxu0
        %1523 = vmatprep.mubr.f32.mxu0 0.0
        %v1524 = vand.u32 %v217, 4294901760
        %v1525 = vsub.f32 %v217, %v1524
        %v1526 = vand.u32 %v1525, 4294901760
        %1527 = vmatmul.mubr.f32.gmra.mxu0 %v1526
        %v1528 = vpop.f32.mrf.mxu0
        %v1529 = vadd.f32 %v1206, %v1528
        %v1530 = vpop.f32.mrf.mxu0
        %1531 = vmatprep.mubr.f32.mxu0 0.0
        %v1532 = vand.u32 %v218, 4294901760
        %v1533 = vsub.f32 %v218, %v1532
        %v1534 = vand.u32 %v1533, 4294901760
        %1535 = vmatmul.mubr.f32.gmra.mxu0 %v1534
        %v1536 = vpop.f32.mrf.mxu0
        %v1537 = vadd.f32 %v1213, %v1536
        %v1538 = vpop.f32.mrf.mxu0
        %1539 = vmatprep.mubr.f32.mxu0 0.0
        %v1540 = vand.u32 %v219, 4294901760
        %v1541 = vsub.f32 %v219, %v1540
        %v1542 = vand.u32 %v1541, 4294901760
        %1543 = vmatmul.mubr.f32.gmra.mxu0 %v1542
        %v1544 = vpop.f32.mrf.mxu0
        %v1545 = vadd.f32 %v1220, %v1544
        %v1546 = vpop.f32.mrf.mxu0
        %1547 = vmatprep.mubr.f32.mxu0 0.0
        %v1548 = vand.u32 %v220, 4294901760
        %v1549 = vsub.f32 %v220, %v1548
        %v1550 = vand.u32 %v1549, 4294901760
        %1551 = vmatmul.mubr.f32.gmra.mxu0 %v1550
        %v1552 = vpop.f32.mrf.mxu0
        %v1553 = vadd.f32 %v1227, %v1552
        %v1554 = vpop.f32.mrf.mxu0
        %1555 = vmatprep.mubr.f32.mxu0 0.0
        %v1556 = vand.u32 %v221, 4294901760
        %v1557 = vsub.f32 %v221, %v1556
        %v1558 = vand.u32 %v1557, 4294901760
        %1559 = vmatmul.mubr.f32.gmra.mxu0 %v1558
        %v1560 = vpop.f32.mrf.mxu0
        %v1561 = vadd.f32 %v1234, %v1560
        %v1562 = vpop.f32.mrf.mxu0
        %1563 = vmatprep.mubr.f32.mxu0 0.0
        %v1564 = vand.u32 %v222, 4294901760
        %v1565 = vsub.f32 %v222, %v1564
        %v1566 = vand.u32 %v1565, 4294901760
        %1567 = vmatmul.mubr.f32.gmra.mxu0 %v1566
        %v1568 = vpop.f32.mrf.mxu0
        %v1569 = vadd.f32 %v1241, %v1568
        %v1570 = vpop.f32.mrf.mxu0
        %1571 = vmatprep.mubr.f32.mxu0 0.0
        %v1572 = vand.u32 %v223, 4294901760
        %v1573 = vsub.f32 %v223, %v1572
        %v1574 = vand.u32 %v1573, 4294901760
        %1575 = vmatmul.mubr.f32.gmra.mxu0 %v1574
        %v1576 = vpop.f32.mrf.mxu0
        %v1577 = vadd.f32 %v1248, %v1576
        %v1578 = vpop.f32.mrf.mxu0
        %1579 = vmatprep.mubr.f32.mxu0 0.0
        %v1580 = vand.u32 %v224, 4294901760
        %v1581 = vsub.f32 %v224, %v1580
        %v1582 = vand.u32 %v1581, 4294901760
        %1583 = vmatmul.mubr.f32.gmra.mxu0 %v1582
        %v1584 = vpop.f32.mrf.mxu0
        %v1585 = vadd.f32 %v1255, %v1584
        %v1586 = vpop.f32.mrf.mxu0
        %1587 = vmatprep.mubr.f32.mxu0 0.0
        %v1588 = vand.u32 %v225, 4294901760
        %v1589 = vsub.f32 %v225, %v1588
        %v1590 = vand.u32 %v1589, 4294901760
        %1591 = vmatmul.mubr.f32.gmra.mxu0 %v1590
        %v1592 = vpop.f32.mrf.mxu0
        %v1593 = vadd.f32 %v1262, %v1592
        %v1594 = vpop.f32.mrf.mxu0
        %1595 = vmatprep.mubr.f32.mxu0 0.0
        %v1596 = vand.u32 %v226, 4294901760
        %v1597 = vsub.f32 %v226, %v1596
        %v1598 = vand.u32 %v1597, 4294901760
        %1599 = vmatmul.mubr.f32.gmra.mxu0 %v1598
        %v1600 = vpop.f32.mrf.mxu0
        %v1601 = vadd.f32 %v1269, %v1600
        %v1602 = vpop.f32.mrf.mxu0
        %1603 = vmatprep.mubr.f32.mxu0 0.0
        %v1604 = vand.u32 %v227, 4294901760
        %v1605 = vsub.f32 %v227, %v1604
        %v1606 = vand.u32 %v1605, 4294901760
        %1607 = vmatmul.mubr.f32.gmra.mxu0 %v1606
        %v1608 = vpop.f32.mrf.mxu0
        %v1609 = vadd.f32 %v1276, %v1608
        %v1610 = vpop.f32.mrf.mxu0
        %1611 = vmatprep.mubr.f32.mxu0 0.0
        %v1612 = vand.u32 %v228, 4294901760
        %v1613 = vsub.f32 %v228, %v1612
        %v1614 = vand.u32 %v1613, 4294901760
        %1615 = vmatmul.mubr.f32.gmra.mxu0 %v1614
        %v1616 = vpop.f32.mrf.mxu0
        %v1617 = vadd.f32 %v1283, %v1616
        %v1618 = vpop.f32.mrf.mxu0
        %1619 = vmatprep.mubr.f32.mxu0 0.0
        %v1620 = vand.u32 %v229, 4294901760
        %v1621 = vsub.f32 %v229, %v1620
        %v1622 = vand.u32 %v1621, 4294901760
        %1623 = vmatmul.mubr.f32.gmra.mxu0 %v1622
        %v1624 = vpop.f32.mrf.mxu0
        %v1625 = vadd.f32 %v1290, %v1624
        %v1626 = vpop.f32.mrf.mxu0
        %1627 = vmatprep.mubr.f32.mxu0 0.0
        %v1628 = vand.u32 %v230, 4294901760
        %v1629 = vsub.f32 %v230, %v1628
        %v1630 = vand.u32 %v1629, 4294901760
        %1631 = vmatmul.mubr.f32.gmra.mxu0 %v1630
        %v1632 = vpop.f32.mrf.mxu0
        %v1633 = vadd.f32 %v1297, %v1632
        %v1634 = vpop.f32.mrf.mxu0
        %1635 = vmatprep.mubr.f32.mxu0 0.0
        %v1636 = vand.u32 %v231, 4294901760
        %v1637 = vsub.f32 %v231, %v1636
        %v1638 = vand.u32 %v1637, 4294901760
        %1639 = vmatmul.mubr.f32.gmra.mxu0 %v1638
        %v1640 = vpop.f32.mrf.mxu0
        %v1641 = vadd.f32 %v1304, %v1640
        %v1642 = vpop.f32.mrf.mxu0
        %1643 = vdwg.mxu0
        %1644 = vmatprep.subr.mxu0 0.0
        %v1645 = vand.u32 %v247, 4294901760
        %v1646 = vsub.f32 %v247, %v1645
        %v1647 = vand.u32 %v1646, 4294901760
        %1648 = vmatpush1.msra.mxu0 %v1647
        %1649 = vmatprep.subr.mxu0 0.0
        %v1650 = vand.u32 %v246, 4294901760
        %v1651 = vsub.f32 %v246, %v1650
        %v1652 = vand.u32 %v1651, 4294901760
        %1653 = vmatpush1.msra.mxu0 %v1652
        %1654 = vmatprep.subr.mxu0 0.0
        %v1655 = vand.u32 %v245, 4294901760
        %v1656 = vsub.f32 %v245, %v1655
        %v1657 = vand.u32 %v1656, 4294901760
        %1658 = vmatpush1.msra.mxu0 %v1657
        %1659 = vmatprep.subr.mxu0 0.0
        %v1660 = vand.u32 %v244, 4294901760
        %v1661 = vsub.f32 %v244, %v1660
        %v1662 = vand.u32 %v1661, 4294901760
        %1663 = vmatpush1.msra.mxu0 %v1662
        %1664 = vmatprep.subr.mxu0 0.0
        %v1665 = vand.u32 %v243, 4294901760
        %v1666 = vsub.f32 %v243, %v1665
        %v1667 = vand.u32 %v1666, 4294901760
        %1668 = vmatpush1.msra.mxu0 %v1667
        %1669 = vmatprep.subr.mxu0 0.0
        %v1670 = vand.u32 %v242, 4294901760
        %v1671 = vsub.f32 %v242, %v1670
        %v1672 = vand.u32 %v1671, 4294901760
        %1673 = vmatpush1.msra.mxu0 %v1672
        %1674 = vmatprep.subr.mxu0 0.0
        %v1675 = vand.u32 %v241, 4294901760
        %v1676 = vsub.f32 %v241, %v1675
        %v1677 = vand.u32 %v1676, 4294901760
        %1678 = vmatpush1.msra.mxu0 %v1677
        %1679 = vmatprep.subr.mxu0 0.0
        %v1680 = vand.u32 %v240, 4294901760
        %v1681 = vsub.f32 %v240, %v1680
        %v1682 = vand.u32 %v1681, 4294901760
        %1683 = vmatpush1.msra.mxu0 %v1682
        %1684 = vmatprep.subr.mxu0 0.0
        %v1685 = vand.u32 %v239, 4294901760
        %v1686 = vsub.f32 %v239, %v1685
        %v1687 = vand.u32 %v1686, 4294901760
        %1688 = vmatpush1.msra.mxu0 %v1687
        %1689 = vmatprep.subr.mxu0 0.0
        %v1690 = vand.u32 %v238, 4294901760
        %v1691 = vsub.f32 %v238, %v1690
        %v1692 = vand.u32 %v1691, 4294901760
        %1693 = vmatpush1.msra.mxu0 %v1692
        %1694 = vmatprep.subr.mxu0 0.0
        %v1695 = vand.u32 %v237, 4294901760
        %v1696 = vsub.f32 %v237, %v1695
        %v1697 = vand.u32 %v1696, 4294901760
        %1698 = vmatpush1.msra.mxu0 %v1697
        %1699 = vmatprep.subr.mxu0 0.0
        %v1700 = vand.u32 %v236, 4294901760
        %v1701 = vsub.f32 %v236, %v1700
        %v1702 = vand.u32 %v1701, 4294901760
        %1703 = vmatpush1.msra.mxu0 %v1702
        %1704 = vmatprep.subr.mxu0 0.0
        %v1705 = vand.u32 %v235, 4294901760
        %v1706 = vsub.f32 %v235, %v1705
        %v1707 = vand.u32 %v1706, 4294901760
        %1708 = vmatpush1.msra.mxu0 %v1707
        %1709 = vmatprep.subr.mxu0 0.0
        %v1710 = vand.u32 %v234, 4294901760
        %v1711 = vsub.f32 %v234, %v1710
        %v1712 = vand.u32 %v1711, 4294901760
        %1713 = vmatpush1.msra.mxu0 %v1712
        %1714 = vmatprep.subr.mxu0 0.0
        %v1715 = vand.u32 %v233, 4294901760
        %v1716 = vsub.f32 %v233, %v1715
        %v1717 = vand.u32 %v1716, 4294901760
        %1718 = vmatpush1.msra.mxu0 %v1717
        %1719 = vmatprep.subr.mxu0 0.0
        %v1720 = vand.u32 %v232, 4294901760
        %v1721 = vsub.f32 %v232, %v1720
        %v1722 = vand.u32 %v1721, 4294901760
        %1723 = vmatpush1.msra.mxu0 %v1722
        %1724 = vmatprep.subr.mxu0 0.0
        %1725 = vmatpush2.msra.mxu0 0.0
        %1726 = vmatprep.subr.mxu0 0.0
        %1727 = vmatpush2.msra.mxu0 0.0
        %1728 = vmatprep.subr.mxu0 0.0
        %1729 = vmatpush2.msra.mxu0 0.0
        %1730 = vmatprep.subr.mxu0 0.0
        %1731 = vmatpush2.msra.mxu0 0.0
        %1732 = vmatprep.subr.mxu0 0.0
        %1733 = vmatpush2.msra.mxu0 0.0
        %1734 = vmatprep.subr.mxu0 0.0
        %1735 = vmatpush2.msra.mxu0 0.0
        %1736 = vmatprep.subr.mxu0 0.0
        %1737 = vmatpush2.msra.mxu0 0.0
        %1738 = vmatprep.subr.mxu0 0.0
        %1739 = vmatpush2.msra.mxu0 0.0
        %1740 = vmatprep.subr.mxu0 0.0
        %1741 = vmatpush2.msra.mxu0 0.0
        %1742 = vmatprep.subr.mxu0 0.0
        %1743 = vmatpush2.msra.mxu0 0.0
        %1744 = vmatprep.subr.mxu0 0.0
        %1745 = vmatpush2.msra.mxu0 0.0
        %1746 = vmatprep.subr.mxu0 0.0
        %1747 = vmatpush2.msra.mxu0 0.0
        %1748 = vmatprep.subr.mxu0 0.0
        %1749 = vmatpush2.msra.mxu0 0.0
        %1750 = vmatprep.subr.mxu0 0.0
        %1751 = vmatpush2.msra.mxu0 0.0
        %1752 = vmatprep.subr.mxu0 0.0
        %1753 = vmatpush2.msra.mxu0 0.0
        %1754 = vmatprep.subr.mxu0 0.0
        %1755 = vmatpush2.msra.mxu0 0.0
        %1756 = vmatprep.mubr.f32.mxu0 0.0
        %v1757 = vand.u32 %v200, 4294901760
        %1758 = vmatmul.mubr.f32.gmra.mxu0 %v1757
        %v1759 = vpop.f32.mrf.mxu0
        %v1760 = vadd.f32 %v1393, %v1759
        %v1761 = vpop.f32.mrf.mxu0
        %1762 = vmatprep.mubr.f32.mxu0 0.0
        %v1763 = vand.u32 %v201, 4294901760
        %1764 = vmatmul.mubr.f32.gmra.mxu0 %v1763
        %v1765 = vpop.f32.mrf.mxu0
        %v1766 = vadd.f32 %v1401, %v1765
        %v1767 = vpop.f32.mrf.mxu0
        %1768 = vmatprep.mubr.f32.mxu0 0.0
        %v1769 = vand.u32 %v202, 4294901760
        %1770 = vmatmul.mubr.f32.gmra.mxu0 %v1769
        %v1771 = vpop.f32.mrf.mxu0
        %v1772 = vadd.f32 %v1409, %v1771
        %v1773 = vpop.f32.mrf.mxu0
        %1774 = vmatprep.mubr.f32.mxu0 0.0
        %v1775 = vand.u32 %v203, 4294901760
        %1776 = vmatmul.mubr.f32.gmra.mxu0 %v1775
        %v1777 = vpop.f32.mrf.mxu0
        %v1778 = vadd.f32 %v1417, %v1777
        %v1779 = vpop.f32.mrf.mxu0
        %1780 = vmatprep.mubr.f32.mxu0 0.0
        %v1781 = vand.u32 %v204, 4294901760
        %1782 = vmatmul.mubr.f32.gmra.mxu0 %v1781
        %v1783 = vpop.f32.mrf.mxu0
        %v1784 = vadd.f32 %v1425, %v1783
        %v1785 = vpop.f32.mrf.mxu0
        %1786 = vmatprep.mubr.f32.mxu0 0.0
        %v1787 = vand.u32 %v205, 4294901760
        %1788 = vmatmul.mubr.f32.gmra.mxu0 %v1787
        %v1789 = vpop.f32.mrf.mxu0
        %v1790 = vadd.f32 %v1433, %v1789
        %v1791 = vpop.f32.mrf.mxu0
        %1792 = vmatprep.mubr.f32.mxu0 0.0
        %v1793 = vand.u32 %v206, 4294901760
        %1794 = vmatmul.mubr.f32.gmra.mxu0 %v1793
        %v1795 = vpop.f32.mrf.mxu0
        %v1796 = vadd.f32 %v1441, %v1795
        %v1797 = vpop.f32.mrf.mxu0
        %1798 = vmatprep.mubr.f32.mxu0 0.0
        %v1799 = vand.u32 %v207, 4294901760
        %1800 = vmatmul.mubr.f32.gmra.mxu0 %v1799
        %v1801 = vpop.f32.mrf.mxu0
        %v1802 = vadd.f32 %v1449, %v1801
        %v1803 = vpop.f32.mrf.mxu0
        %1804 = vmatprep.mubr.f32.mxu0 0.0
        %v1805 = vand.u32 %v208, 4294901760
        %1806 = vmatmul.mubr.f32.gmra.mxu0 %v1805
        %v1807 = vpop.f32.mrf.mxu0
        %v1808 = vadd.f32 %v1457, %v1807
        %v1809 = vpop.f32.mrf.mxu0
        %1810 = vmatprep.mubr.f32.mxu0 0.0
        %v1811 = vand.u32 %v209, 4294901760
        %1812 = vmatmul.mubr.f32.gmra.mxu0 %v1811
        %v1813 = vpop.f32.mrf.mxu0
        %v1814 = vadd.f32 %v1465, %v1813
        %v1815 = vpop.f32.mrf.mxu0
        %1816 = vmatprep.mubr.f32.mxu0 0.0
        %v1817 = vand.u32 %v210, 4294901760
        %1818 = vmatmul.mubr.f32.gmra.mxu0 %v1817
        %v1819 = vpop.f32.mrf.mxu0
        %v1820 = vadd.f32 %v1473, %v1819
        %v1821 = vpop.f32.mrf.mxu0
        %1822 = vmatprep.mubr.f32.mxu0 0.0
        %v1823 = vand.u32 %v211, 4294901760
        %1824 = vmatmul.mubr.f32.gmra.mxu0 %v1823
        %v1825 = vpop.f32.mrf.mxu0
        %v1826 = vadd.f32 %v1481, %v1825
        %v1827 = vpop.f32.mrf.mxu0
        %1828 = vmatprep.mubr.f32.mxu0 0.0
        %v1829 = vand.u32 %v212, 4294901760
        %1830 = vmatmul.mubr.f32.gmra.mxu0 %v1829
        %v1831 = vpop.f32.mrf.mxu0
        %v1832 = vadd.f32 %v1489, %v1831
        %v1833 = vpop.f32.mrf.mxu0
        %1834 = vmatprep.mubr.f32.mxu0 0.0
        %v1835 = vand.u32 %v213, 4294901760
        %1836 = vmatmul.mubr.f32.gmra.mxu0 %v1835
        %v1837 = vpop.f32.mrf.mxu0
        %v1838 = vadd.f32 %v1497, %v1837
        %v1839 = vpop.f32.mrf.mxu0
        %1840 = vmatprep.mubr.f32.mxu0 0.0
        %v1841 = vand.u32 %v214, 4294901760
        %1842 = vmatmul.mubr.f32.gmra.mxu0 %v1841
        %v1843 = vpop.f32.mrf.mxu0
        %v1844 = vadd.f32 %v1505, %v1843
        %v1845 = vpop.f32.mrf.mxu0
        %1846 = vmatprep.mubr.f32.mxu0 0.0
        %v1847 = vand.u32 %v215, 4294901760
        %1848 = vmatmul.mubr.f32.gmra.mxu0 %v1847
        %v1849 = vpop.f32.mrf.mxu0
        %v1850 = vadd.f32 %v1513, %v1849
        %v1851 = vpop.f32.mrf.mxu0
        %1852 = vmatprep.mubr.f32.mxu0 0.0
        %v1853 = vand.u32 %v216, 4294901760
        %1854 = vmatmul.mubr.f32.gmra.mxu0 %v1853
        %v1855 = vpop.f32.mrf.mxu0
        %v1856 = vadd.f32 %v1521, %v1855
        %v1857 = vpop.f32.mrf.mxu0
        %1858 = vmatprep.mubr.f32.mxu0 0.0
        %v1859 = vand.u32 %v217, 4294901760
        %1860 = vmatmul.mubr.f32.gmra.mxu0 %v1859
        %v1861 = vpop.f32.mrf.mxu0
        %v1862 = vadd.f32 %v1529, %v1861
        %v1863 = vpop.f32.mrf.mxu0
        %1864 = vmatprep.mubr.f32.mxu0 0.0
        %v1865 = vand.u32 %v218, 4294901760
        %1866 = vmatmul.mubr.f32.gmra.mxu0 %v1865
        %v1867 = vpop.f32.mrf.mxu0
        %v1868 = vadd.f32 %v1537, %v1867
        %v1869 = vpop.f32.mrf.mxu0
        %1870 = vmatprep.mubr.f32.mxu0 0.0
        %v1871 = vand.u32 %v219, 4294901760
        %1872 = vmatmul.mubr.f32.gmra.mxu0 %v1871
        %v1873 = vpop.f32.mrf.mxu0
        %v1874 = vadd.f32 %v1545, %v1873
        %v1875 = vpop.f32.mrf.mxu0
        %1876 = vmatprep.mubr.f32.mxu0 0.0
        %v1877 = vand.u32 %v220, 4294901760
        %1878 = vmatmul.mubr.f32.gmra.mxu0 %v1877
        %v1879 = vpop.f32.mrf.mxu0
        %v1880 = vadd.f32 %v1553, %v1879
        %v1881 = vpop.f32.mrf.mxu0
        %1882 = vmatprep.mubr.f32.mxu0 0.0
        %v1883 = vand.u32 %v221, 4294901760
        %1884 = vmatmul.mubr.f32.gmra.mxu0 %v1883
        %v1885 = vpop.f32.mrf.mxu0
        %v1886 = vadd.f32 %v1561, %v1885
        %v1887 = vpop.f32.mrf.mxu0
        %1888 = vmatprep.mubr.f32.mxu0 0.0
        %v1889 = vand.u32 %v222, 4294901760
        %1890 = vmatmul.mubr.f32.gmra.mxu0 %v1889
        %v1891 = vpop.f32.mrf.mxu0
        %v1892 = vadd.f32 %v1569, %v1891
        %v1893 = vpop.f32.mrf.mxu0
        %1894 = vmatprep.mubr.f32.mxu0 0.0
        %v1895 = vand.u32 %v223, 4294901760
        %1896 = vmatmul.mubr.f32.gmra.mxu0 %v1895
        %v1897 = vpop.f32.mrf.mxu0
        %v1898 = vadd.f32 %v1577, %v1897
        %v1899 = vpop.f32.mrf.mxu0
        %1900 = vmatprep.mubr.f32.mxu0 0.0
        %v1901 = vand.u32 %v224, 4294901760
        %1902 = vmatmul.mubr.f32.gmra.mxu0 %v1901
        %v1903 = vpop.f32.mrf.mxu0
        %v1904 = vadd.f32 %v1585, %v1903
        %v1905 = vpop.f32.mrf.mxu0
        %1906 = vmatprep.mubr.f32.mxu0 0.0
        %v1907 = vand.u32 %v225, 4294901760
        %1908 = vmatmul.mubr.f32.gmra.mxu0 %v1907
        %v1909 = vpop.f32.mrf.mxu0
        %v1910 = vadd.f32 %v1593, %v1909
        %v1911 = vpop.f32.mrf.mxu0
        %1912 = vmatprep.mubr.f32.mxu0 0.0
        %v1913 = vand.u32 %v226, 4294901760
        %1914 = vmatmul.mubr.f32.gmra.mxu0 %v1913
        %v1915 = vpop.f32.mrf.mxu0
        %v1916 = vadd.f32 %v1601, %v1915
        %v1917 = vpop.f32.mrf.mxu0
        %1918 = vmatprep.mubr.f32.mxu0 0.0
        %v1919 = vand.u32 %v227, 4294901760
        %1920 = vmatmul.mubr.f32.gmra.mxu0 %v1919
        %v1921 = vpop.f32.mrf.mxu0
        %v1922 = vadd.f32 %v1609, %v1921
        %v1923 = vpop.f32.mrf.mxu0
        %1924 = vmatprep.mubr.f32.mxu0 0.0
        %v1925 = vand.u32 %v228, 4294901760
        %1926 = vmatmul.mubr.f32.gmra.mxu0 %v1925
        %v1927 = vpop.f32.mrf.mxu0
        %v1928 = vadd.f32 %v1617, %v1927
        %v1929 = vpop.f32.mrf.mxu0
        %1930 = vmatprep.mubr.f32.mxu0 0.0
        %v1931 = vand.u32 %v229, 4294901760
        %1932 = vmatmul.mubr.f32.gmra.mxu0 %v1931
        %v1933 = vpop.f32.mrf.mxu0
        %v1934 = vadd.f32 %v1625, %v1933
        %v1935 = vpop.f32.mrf.mxu0
        %1936 = vmatprep.mubr.f32.mxu0 0.0
        %v1937 = vand.u32 %v230, 4294901760
        %1938 = vmatmul.mubr.f32.gmra.mxu0 %v1937
        %v1939 = vpop.f32.mrf.mxu0
        %v1940 = vadd.f32 %v1633, %v1939
        %v1941 = vpop.f32.mrf.mxu0
        %1942 = vmatprep.mubr.f32.mxu0 0.0
        %v1943 = vand.u32 %v231, 4294901760
        %1944 = vmatmul.mubr.f32.gmra.mxu0 %v1943
        %v1945 = vpop.f32.mrf.mxu0
        %v1946 = vadd.f32 %v1641, %v1945
        %v1947 = vpop.f32.mrf.mxu0
        %1948 = vdwg.mxu0
        %1949 = vmatprep.subr.mxu0 0.0
        %v1950 = vand.u32 %v247, 4294901760
        %1951 = vmatpush1.msra.mxu0 %v1950
        %1952 = vmatprep.subr.mxu0 0.0
        %v1953 = vand.u32 %v246, 4294901760
        %1954 = vmatpush1.msra.mxu0 %v1953
        %1955 = vmatprep.subr.mxu0 0.0
        %v1956 = vand.u32 %v245, 4294901760
        %1957 = vmatpush1.msra.mxu0 %v1956
        %1958 = vmatprep.subr.mxu0 0.0
        %v1959 = vand.u32 %v244, 4294901760
        %1960 = vmatpush1.msra.mxu0 %v1959
        %1961 = vmatprep.subr.mxu0 0.0
        %v1962 = vand.u32 %v243, 4294901760
        %1963 = vmatpush1.msra.mxu0 %v1962
        %1964 = vmatprep.subr.mxu0 0.0
        %v1965 = vand.u32 %v242, 4294901760
        %1966 = vmatpush1.msra.mxu0 %v1965
        %1967 = vmatprep.subr.mxu0 0.0
        %v1968 = vand.u32 %v241, 4294901760
        %1969 = vmatpush1.msra.mxu0 %v1968
        %1970 = vmatprep.subr.mxu0 0.0
        %v1971 = vand.u32 %v240, 4294901760
        %1972 = vmatpush1.msra.mxu0 %v1971
        %1973 = vmatprep.subr.mxu0 0.0
        %v1974 = vand.u32 %v239, 4294901760
        %1975 = vmatpush1.msra.mxu0 %v1974
        %1976 = vmatprep.subr.mxu0 0.0
        %v1977 = vand.u32 %v238, 4294901760
        %1978 = vmatpush1.msra.mxu0 %v1977
        %1979 = vmatprep.subr.mxu0 0.0
        %v1980 = vand.u32 %v237, 4294901760
        %1981 = vmatpush1.msra.mxu0 %v1980
        %1982 = vmatprep.subr.mxu0 0.0
        %v1983 = vand.u32 %v236, 4294901760
        %1984 = vmatpush1.msra.mxu0 %v1983
        %1985 = vmatprep.subr.mxu0 0.0
        %v1986 = vand.u32 %v235, 4294901760
        %1987 = vmatpush1.msra.mxu0 %v1986
        %1988 = vmatprep.subr.mxu0 0.0
        %v1989 = vand.u32 %v234, 4294901760
        %1990 = vmatpush1.msra.mxu0 %v1989
        %1991 = vmatprep.subr.mxu0 0.0
        %v1992 = vand.u32 %v233, 4294901760
        %1993 = vmatpush1.msra.mxu0 %v1992
        %1994 = vmatprep.subr.mxu0 0.0
        %v1995 = vand.u32 %v232, 4294901760
        %1996 = vmatpush1.msra.mxu0 %v1995
        %1997 = vmatprep.subr.mxu0 0.0
        %1998 = vmatpush2.msra.mxu0 0.0
        %1999 = vmatprep.subr.mxu0 0.0
        %2000 = vmatpush2.msra.mxu0 0.0
        %2001 = vmatprep.subr.mxu0 0.0
        %2002 = vmatpush2.msra.mxu0 0.0
        %2003 = vmatprep.subr.mxu0 0.0
        %2004 = vmatpush2.msra.mxu0 0.0
        %2005 = vmatprep.subr.mxu0 0.0
        %2006 = vmatpush2.msra.mxu0 0.0
        %2007 = vmatprep.subr.mxu0 0.0
        %2008 = vmatpush2.msra.mxu0 0.0
        %2009 = vmatprep.subr.mxu0 0.0
        %2010 = vmatpush2.msra.mxu0 0.0
        %2011 = vmatprep.subr.mxu0 0.0
        %2012 = vmatpush2.msra.mxu0 0.0
        %2013 = vmatprep.subr.mxu0 0.0
        %2014 = vmatpush2.msra.mxu0 0.0
        %2015 = vmatprep.subr.mxu0 0.0
        %2016 = vmatpush2.msra.mxu0 0.0
        %2017 = vmatprep.subr.mxu0 0.0
        %2018 = vmatpush2.msra.mxu0 0.0
        %2019 = vmatprep.subr.mxu0 0.0
        %2020 = vmatpush2.msra.mxu0 0.0
        %2021 = vmatprep.subr.mxu0 0.0
        %2022 = vmatpush2.msra.mxu0 0.0
        %2023 = vmatprep.subr.mxu0 0.0
        %2024 = vmatpush2.msra.mxu0 0.0
        %2025 = vmatprep.subr.mxu0 0.0
        %2026 = vmatpush2.msra.mxu0 0.0
        %2027 = vmatprep.subr.mxu0 0.0
        %2028 = vmatpush2.msra.mxu0 0.0
        %2029 = vmatprep.mubr.f32.mxu0 0.0
        %v2030 = vand.u32 %v200, 4294901760
        %2031 = vmatmul.mubr.f32.gmra.mxu0 %v2030
        %v2032 = vpop.f32.mrf.mxu0
        %v2033 = vadd.f32 %v1760, %v2032
        %v2034 = vpop.f32.mrf.mxu0
        %2035 = vmatprep.mubr.f32.mxu0 0.0
        %v2036 = vand.u32 %v201, 4294901760
        %2037 = vmatmul.mubr.f32.gmra.mxu0 %v2036
        %v2038 = vpop.f32.mrf.mxu0
        %v2039 = vadd.f32 %v1766, %v2038
        %v2040 = vpop.f32.mrf.mxu0
        %2041 = vmatprep.mubr.f32.mxu0 0.0
        %v2042 = vand.u32 %v202, 4294901760
        %2043 = vmatmul.mubr.f32.gmra.mxu0 %v2042
        %v2044 = vpop.f32.mrf.mxu0
        %v2045 = vadd.f32 %v1772, %v2044
        %v2046 = vpop.f32.mrf.mxu0
        %2047 = vmatprep.mubr.f32.mxu0 0.0
        %v2048 = vand.u32 %v203, 4294901760
        %2049 = vmatmul.mubr.f32.gmra.mxu0 %v2048
        %v2050 = vpop.f32.mrf.mxu0
        %v2051 = vadd.f32 %v1778, %v2050
        %v2052 = vpop.f32.mrf.mxu0
        %2053 = vmatprep.mubr.f32.mxu0 0.0
        %v2054 = vand.u32 %v204, 4294901760
        %2055 = vmatmul.mubr.f32.gmra.mxu0 %v2054
        %v2056 = vpop.f32.mrf.mxu0
        %v2057 = vadd.f32 %v1784, %v2056
        %v2058 = vpop.f32.mrf.mxu0
        %2059 = vmatprep.mubr.f32.mxu0 0.0
        %v2060 = vand.u32 %v205, 4294901760
        %2061 = vmatmul.mubr.f32.gmra.mxu0 %v2060
        %v2062 = vpop.f32.mrf.mxu0
        %v2063 = vadd.f32 %v1790, %v2062
        %v2064 = vpop.f32.mrf.mxu0
        %2065 = vmatprep.mubr.f32.mxu0 0.0
        %v2066 = vand.u32 %v206, 4294901760
        %2067 = vmatmul.mubr.f32.gmra.mxu0 %v2066
        %v2068 = vpop.f32.mrf.mxu0
        %v2069 = vadd.f32 %v1796, %v2068
        %v2070 = vpop.f32.mrf.mxu0
        %2071 = vmatprep.mubr.f32.mxu0 0.0
        %v2072 = vand.u32 %v207, 4294901760
        %2073 = vmatmul.mubr.f32.gmra.mxu0 %v2072
        %v2074 = vpop.f32.mrf.mxu0
        %v2075 = vadd.f32 %v1802, %v2074
        %v2076 = vpop.f32.mrf.mxu0
        %2077 = vmatprep.mubr.f32.mxu0 0.0
        %v2078 = vand.u32 %v208, 4294901760
        %2079 = vmatmul.mubr.f32.gmra.mxu0 %v2078
        %v2080 = vpop.f32.mrf.mxu0
        %v2081 = vadd.f32 %v1808, %v2080
        %v2082 = vpop.f32.mrf.mxu0
        %2083 = vmatprep.mubr.f32.mxu0 0.0
        %v2084 = vand.u32 %v209, 4294901760
        %2085 = vmatmul.mubr.f32.gmra.mxu0 %v2084
        %v2086 = vpop.f32.mrf.mxu0
        %v2087 = vadd.f32 %v1814, %v2086
        %v2088 = vpop.f32.mrf.mxu0
        %2089 = vmatprep.mubr.f32.mxu0 0.0
        %v2090 = vand.u32 %v210, 4294901760
        %2091 = vmatmul.mubr.f32.gmra.mxu0 %v2090
        %v2092 = vpop.f32.mrf.mxu0
        %v2093 = vadd.f32 %v1820, %v2092
        %v2094 = vpop.f32.mrf.mxu0
        %2095 = vmatprep.mubr.f32.mxu0 0.0
        %v2096 = vand.u32 %v211, 4294901760
        %2097 = vmatmul.mubr.f32.gmra.mxu0 %v2096
        %v2098 = vpop.f32.mrf.mxu0
        %v2099 = vadd.f32 %v1826, %v2098
        %v2100 = vpop.f32.mrf.mxu0
        %2101 = vmatprep.mubr.f32.mxu0 0.0
        %v2102 = vand.u32 %v212, 4294901760
        %2103 = vmatmul.mubr.f32.gmra.mxu0 %v2102
        %v2104 = vpop.f32.mrf.mxu0
        %v2105 = vadd.f32 %v1832, %v2104
        %v2106 = vpop.f32.mrf.mxu0
        %2107 = vmatprep.mubr.f32.mxu0 0.0
        %v2108 = vand.u32 %v213, 4294901760
        %2109 = vmatmul.mubr.f32.gmra.mxu0 %v2108
        %v2110 = vpop.f32.mrf.mxu0
        %v2111 = vadd.f32 %v1838, %v2110
        %v2112 = vpop.f32.mrf.mxu0
        %2113 = vmatprep.mubr.f32.mxu0 0.0
        %v2114 = vand.u32 %v214, 4294901760
        %2115 = vmatmul.mubr.f32.gmra.mxu0 %v2114
        %v2116 = vpop.f32.mrf.mxu0
        %v2117 = vadd.f32 %v1844, %v2116
        %v2118 = vpop.f32.mrf.mxu0
        %2119 = vmatprep.mubr.f32.mxu0 0.0
        %v2120 = vand.u32 %v215, 4294901760
        %2121 = vmatmul.mubr.f32.gmra.mxu0 %v2120
        %v2122 = vpop.f32.mrf.mxu0
        %v2123 = vadd.f32 %v1850, %v2122
        %v2124 = vpop.f32.mrf.mxu0
        %2125 = vmatprep.mubr.f32.mxu0 0.0
        %v2126 = vand.u32 %v216, 4294901760
        %2127 = vmatmul.mubr.f32.gmra.mxu0 %v2126
        %v2128 = vpop.f32.mrf.mxu0
        %v2129 = vadd.f32 %v1856, %v2128
        %v2130 = vpop.f32.mrf.mxu0
        %2131 = vmatprep.mubr.f32.mxu0 0.0
        %v2132 = vand.u32 %v217, 4294901760
        %2133 = vmatmul.mubr.f32.gmra.mxu0 %v2132
        %v2134 = vpop.f32.mrf.mxu0
        %v2135 = vadd.f32 %v1862, %v2134
        %v2136 = vpop.f32.mrf.mxu0
        %2137 = vmatprep.mubr.f32.mxu0 0.0
        %v2138 = vand.u32 %v218, 4294901760
        %2139 = vmatmul.mubr.f32.gmra.mxu0 %v2138
        %v2140 = vpop.f32.mrf.mxu0
        %v2141 = vadd.f32 %v1868, %v2140
        %v2142 = vpop.f32.mrf.mxu0
        %2143 = vmatprep.mubr.f32.mxu0 0.0
        %v2144 = vand.u32 %v219, 4294901760
        %2145 = vmatmul.mubr.f32.gmra.mxu0 %v2144
        %v2146 = vpop.f32.mrf.mxu0
        %v2147 = vadd.f32 %v1874, %v2146
        %v2148 = vpop.f32.mrf.mxu0
        %2149 = vmatprep.mubr.f32.mxu0 0.0
        %v2150 = vand.u32 %v220, 4294901760
        %2151 = vmatmul.mubr.f32.gmra.mxu0 %v2150
        %v2152 = vpop.f32.mrf.mxu0
        %v2153 = vadd.f32 %v1880, %v2152
        %v2154 = vpop.f32.mrf.mxu0
        %2155 = vmatprep.mubr.f32.mxu0 0.0
        %v2156 = vand.u32 %v221, 4294901760
        %2157 = vmatmul.mubr.f32.gmra.mxu0 %v2156
        %v2158 = vpop.f32.mrf.mxu0
        %v2159 = vadd.f32 %v1886, %v2158
        %v2160 = vpop.f32.mrf.mxu0
        %2161 = vmatprep.mubr.f32.mxu0 0.0
        %v2162 = vand.u32 %v222, 4294901760
        %2163 = vmatmul.mubr.f32.gmra.mxu0 %v2162
        %v2164 = vpop.f32.mrf.mxu0
        %v2165 = vadd.f32 %v1892, %v2164
        %v2166 = vpop.f32.mrf.mxu0
        %2167 = vmatprep.mubr.f32.mxu0 0.0
        %v2168 = vand.u32 %v223, 4294901760
        %2169 = vmatmul.mubr.f32.gmra.mxu0 %v2168
        %v2170 = vpop.f32.mrf.mxu0
        %v2171 = vadd.f32 %v1898, %v2170
        %v2172 = vpop.f32.mrf.mxu0
        %2173 = vmatprep.mubr.f32.mxu0 0.0
        %v2174 = vand.u32 %v224, 4294901760
        %2175 = vmatmul.mubr.f32.gmra.mxu0 %v2174
        %v2176 = vpop.f32.mrf.mxu0
        %v2177 = vadd.f32 %v1904, %v2176
        %v2178 = vpop.f32.mrf.mxu0
        %2179 = vmatprep.mubr.f32.mxu0 0.0
        %v2180 = vand.u32 %v225, 4294901760
        %2181 = vmatmul.mubr.f32.gmra.mxu0 %v2180
        %v2182 = vpop.f32.mrf.mxu0
        %v2183 = vadd.f32 %v1910, %v2182
        %v2184 = vpop.f32.mrf.mxu0
        %2185 = vmatprep.mubr.f32.mxu0 0.0
        %v2186 = vand.u32 %v226, 4294901760
        %2187 = vmatmul.mubr.f32.gmra.mxu0 %v2186
        %v2188 = vpop.f32.mrf.mxu0
        %v2189 = vadd.f32 %v1916, %v2188
        %v2190 = vpop.f32.mrf.mxu0
        %2191 = vmatprep.mubr.f32.mxu0 0.0
        %v2192 = vand.u32 %v227, 4294901760
        %2193 = vmatmul.mubr.f32.gmra.mxu0 %v2192
        %v2194 = vpop.f32.mrf.mxu0
        %v2195 = vadd.f32 %v1922, %v2194
        %v2196 = vpop.f32.mrf.mxu0
        %2197 = vmatprep.mubr.f32.mxu0 0.0
        %v2198 = vand.u32 %v228, 4294901760
        %2199 = vmatmul.mubr.f32.gmra.mxu0 %v2198
        %v2200 = vpop.f32.mrf.mxu0
        %v2201 = vadd.f32 %v1928, %v2200
        %v2202 = vpop.f32.mrf.mxu0
        %2203 = vmatprep.mubr.f32.mxu0 0.0
        %v2204 = vand.u32 %v229, 4294901760
        %2205 = vmatmul.mubr.f32.gmra.mxu0 %v2204
        %v2206 = vpop.f32.mrf.mxu0
        %v2207 = vadd.f32 %v1934, %v2206
        %v2208 = vpop.f32.mrf.mxu0
        %2209 = vmatprep.mubr.f32.mxu0 0.0
        %v2210 = vand.u32 %v230, 4294901760
        %2211 = vmatmul.mubr.f32.gmra.mxu0 %v2210
        %v2212 = vpop.f32.mrf.mxu0
        %v2213 = vadd.f32 %v1940, %v2212
        %v2214 = vpop.f32.mrf.mxu0
        %2215 = vmatprep.mubr.f32.mxu0 0.0
        %v2216 = vand.u32 %v231, 4294901760
        %2217 = vmatmul.mubr.f32.gmra.mxu0 %v2216
        %v2218 = vpop.f32.mrf.mxu0
        %v2219 = vadd.f32 %v1946, %v2218
        %v2220 = vpop.f32.mrf.mxu0
        %2221 = vdwg.mxu0
        %2222 = vst [vmem:[%s197] sm:$0xff] %v2033
        %2223 = vst [vmem:[%s197 + $0x8] sm:$0xff] %v2039
        %2224 = vst [vmem:[%s197 + $0x10] sm:$0xff] %v2045
        %2225 = vst [vmem:[%s197 + $0x18] sm:$0xff] %v2051
        %2226 = vst [vmem:[%s197 + $0x20] sm:$0xff] %v2057
        %2227 = vst [vmem:[%s197 + $0x28] sm:$0xff] %v2063
        %2228 = vst [vmem:[%s197 + $0x30] sm:$0xff] %v2069
        %2229 = vst [vmem:[%s197 + $0x38] sm:$0xff] %v2075
        %2230 = vst [vmem:[%s197 + $0x40] sm:$0xff] %v2081
        %2231 = vst [vmem:[%s197 + $0x48] sm:$0xff] %v2087
        %2232 = vst [vmem:[%s197 + $0x50] sm:$0xff] %v2093
        %2233 = vst [vmem:[%s197 + $0x58] sm:$0xff] %v2099
        %2234 = vst [vmem:[%s197 + $0x60] sm:$0xff] %v2105
        %2235 = vst [vmem:[%s197 + $0x68] sm:$0xff] %v2111
        %2236 = vst [vmem:[%s197 + $0x70] sm:$0xff] %v2117
        %2237 = vst [vmem:[%s197 + $0x78] sm:$0xff] %v2123
        %2238 = vst [vmem:[%s197 + $0x80] sm:$0xff] %v2129
        %2239 = vst [vmem:[%s197 + $0x88] sm:$0xff] %v2135
        %2240 = vst [vmem:[%s197 + $0x90] sm:$0xff] %v2141
        %2241 = vst [vmem:[%s197 + $0x98] sm:$0xff] %v2147
        %2242 = vst [vmem:[%s197 + $0xa0] sm:$0xff] %v2153
        %2243 = vst [vmem:[%s197 + $0xa8] sm:$0xff] %v2159
        %2244 = vst [vmem:[%s197 + $0xb0] sm:$0xff] %v2165
        %2245 = vst [vmem:[%s197 + $0xb8] sm:$0xff] %v2171
        %2246 = vst [vmem:[%s197 + $0xc0] sm:$0xff] %v2177
        %2247 = vst [vmem:[%s197 + $0xc8] sm:$0xff] %v2183
        %2248 = vst [vmem:[%s197 + $0xd0] sm:$0xff] %v2189
        %2249 = vst [vmem:[%s197 + $0xd8] sm:$0xff] %v2195
        %2250 = vst [vmem:[%s197 + $0xe0] sm:$0xff] %v2201
        %2251 = vst [vmem:[%s197 + $0xe8] sm:$0xff] %v2207
        %2252 = vst [vmem:[%s197 + $0xf0] sm:$0xff] %v2213
        %2253 = vst [vmem:[%s197 + $0xf8] sm:$0xff] %v2219
        %s2254 = sand.u32 %s94, 1
        %s2255 = scalar_lea.sflag [#allocation4], %s2254
        %s2256 = sand.u32 %s94, 1
        %s2257 = smul.addr %s2256, 256
        %s2258 = scalar_lea.vmem [#allocation7], %s2257
        // Predicated region
        $region37: #{tpu_custom_call.1} parent=27 // pred_check
          %p2259 = pneg %p104
        $region38: #{tpu_custom_call.1} parent=27 // pred_check_branch
          %2261 = sbr.rel (%p2259) target = $region40
        $region39: #{tpu_custom_call.1} parent=27 // pred_region
          %s2262 = smul.u32 32, %s24
          %s2264 = ssub.s32 4096, 4096
          %2265 = vsyncadd %s2255, %s2264
          %s2266 = sadd.s32 %s25, %s2262
          %s2267 = smul.addr %s2266, 128
          %s2268 = scalar_lea.hbm %s2, %s2267
          %s2269 = sshll.u32 %s2258, 4
          %s2270 = int_to_ptr.vmem [resolvable:$true] %s2269
          %2275 = dma.vmem_to_hbm [thread:$0]  %s2270, 4096, %s2268, %s2255, 128, 128, 8
        $region40: #{tpu_custom_call.1} parent=27 // pred_fallthru
          _
      $region28: #{tpu_custom_call.1} parent=5 // pred_fallthru
        _
      %p2276 = scmp.le.s32.totalorder 2, %s15
      // Predicated region
      $region41: #{tpu_custom_call.1} parent=5 // pred_check
        %p2277 = pneg %p2276
      $region42: #{tpu_custom_call.1} parent=5 // pred_check_branch
        %2279 = sbr.rel (%p2277) target = $region44
      $region43: #{tpu_custom_call.1} parent=5 // pred_region
        %s2280 = ssub.s32 %s15, 2
        // Predicated region
        $region45: #{tpu_custom_call.1} parent=43 // pred_check
          %p2281 = pneg %p110
        $region46: #{tpu_custom_call.1} parent=43 // pred_check_branch
          %2283 = sbr.rel (%p2281) target = $region48
        $region47: #{tpu_custom_call.1} parent=43 // pred_region
          %s2284 = sand.u32 %s95, 1
          %s2285 = scalar_lea.sflag [#allocation4], %s2284
          %s2286 = sand.u32 %s95, 1
          %s2287 = smul.addr %s2286, 256
          %s2288 = scalar_lea.vmem [#allocation7], %s2287
          %2289 = dma.done %s2285, 4096
        $region48: #{tpu_custom_call.1} parent=43 // pred_fallthru
          _
      $region44: #{tpu_custom_call.1} parent=5 // pred_fallthru
        _
    $region6: #{tpu_custom_call.1} parent=1 // loop_footer
      %s19 = sadd.s32 1, %s15
    $region7: #{tpu_custom_call.1} parent=1 // loop_footer_branch
      %14 = sbr.rel target = $region3
    $region8: #{tpu_custom_call.1} parent=1 // loop_exit
      _
    %2290 = vsyncpa [#allocation3], 1
    %s2291 = scalar_lea.sflag [#allocation3], 1
    %2292 = vsyncpa %s2291, 1
    %2293 = vsyncpa [#allocation6], 1
    %2294 = vsyncpa [#allocation4], 1
    %s2295 = scalar_lea.sflag [#allocation4], 1
    %2296 = vsyncpa %s2295, 1

</llo_original>
